<compile_context>
chip_gen: v5e
topology: v5e:2x2
jax: 0.10.0
libtpu: 0.0.40
codegen_flags: <defaults>
</compile_context>

<pallas_src>
import functools
import math

import numpy as np
import jax
import jax.numpy as jnp
from jax.experimental import pallas as pl
from jax.experimental.pallas import tpu as pltpu


# MS-SSIM level weights (same constants as the PyTorch reference).
WEIGHTS = np.array([0.0448, 0.2856, 0.3001, 0.2363, 0.1333], dtype=np.float32)

_MIN_PALLAS_HW = 16      # levels smaller than this run as plain jnp (fused by XLA)
_BF16_MIN_HW = 256       # band-matmul operands go bf16 (f32 accumulate) above this
_NC_BLK_BUDGET = 16 << 20  # per-step VMEM budget estimate for channel-block sizing


def _gaussian_1d(window_size, sigma=1.5):
    """1D Gaussian identical to gaussian(window_size, 1.5) in the reference."""
    g = np.array(
        [math.exp(-((x - window_size // 2) ** 2) / float(2.0 * sigma ** 2))
         for x in range(window_size)],
        dtype=np.float64,
    )
    return (g / g.sum()).astype(np.float32)


def _band_matrices(h, w, wsz):
    """A (hout,h), B (w,wout) such that A @ X @ B == depthwise valid conv with outer(g,g)."""
    g = _gaussian_1d(wsz)
    hout, wout = h - wsz + 1, w - wsz + 1
    a = np.zeros((hout, h), np.float32)
    b = np.zeros((w, wout), np.float32)
    for i in range(hout):
        a[i, i:i + wsz] = g
    for j in range(wout):
        b[j:j + wsz, j] = g
    return a, b


def _pool_matrices(h, w):
    """Pv (h2,h), Ph (w,w2) with Pv @ X @ Ph == avg_pool2d(X, (2,2)) (stride 2, floor)."""
    h2, w2 = h // 2, w // 2
    pv = np.zeros((h2, h), np.float32)
    ph = np.zeros((w, w2), np.float32)
    r = np.arange(h2)
    c = np.arange(w2)
    pv[r, 2 * r] = 0.5
    pv[r, 2 * r + 1] = 0.5
    ph[2 * c, c] = 0.5
    ph[2 * c + 1, c] = 0.5
    return pv, ph


def _block_diag(m, k):
    """k-fold block-diagonal copy of m (channels packed along the lane axis)."""
    r, c = m.shape
    out = np.zeros((k * r, k * c), m.dtype)
    for i in range(k):
        out[i * r:(i + 1) * r, i * c:(i + 1) * c] = m
    return out


def _step_vmem_bytes(nc_blk, h, w, wsz, band_itemsize):
    """Rough per-grid-step VMEM estimate (inputs double-buffered + consts + intermediates)."""
    hout, wout = h - wsz + 1, w - wsz + 1
    ncw, ncwout = nc_blk * w, nc_blk * wout
    h2, w2 = h // 2, w // 2
    ncw2 = nc_blk * w2
    img = h * ncw * 4
    pooled = h2 * ncw2 * 4
    consts = (hout * h + ncw * ncwout) * band_itemsize + (h2 * h + ncw * ncw2) * 4
    inter = (5 * h * ncw + 2 * 5 * h * ncwout + 6 * hout * 5 * ncwout) * 4
    inter += (2 * h * ncw + 2 * 2 * h * ncw2 + 2 * h2 * ncw2) * 4
    return 2 * 2 * img + 2 * 2 * pooled + 2 * consts + inter


def _pick_nc_blk(nc, h, w, wsz, band_itemsize, budget=_NC_BLK_BUDGET):
    """Largest divisor of nc whose per-step working set fits the VMEM budget."""
    best = 1
    for d in range(1, nc + 1):
        if nc % d:
            continue
        if _step_vmem_bytes(d, h, w, wsz, band_itemsize) <= budget:
            best = d
    return best


@functools.lru_cache(maxsize=None)
def _make_level_call(nb, nc_blk, h, w, wsz, emit_pool, band_dtype_name):
    """Build the pallas_call for one pyramid level over nb channel-blocks.

    Each grid step handles one lane-packed (h, nc_blk*w) slab of both images:
    per-block partial sum(ssim_map), sum(cs_map) and, if emit_pool, the pooled
    images (same packed layout) plus per-block max/min of pooled img1.
    """
    band_dtype = jnp.dtype(band_dtype_name)
    hout, wout = h - wsz + 1, w - wsz + 1
    ncw = nc_blk * w
    ncwout = nc_blk * wout
    h2, w2 = h // 2, w // 2
    ncw2 = nc_blk * w2

    def kernel(*refs):
        if emit_pool:
            (c_ref, a_ref, b_ref, pv_ref, ph_ref, x1_ref, x2_ref,
             ssim_ref, cs_ref, mx_ref, mn_ref, p1_ref, p2_ref) = refs
        else:
            (c_ref, a_ref, b_ref, x1_ref, x2_ref, ssim_ref, cs_ref) = refs

        c1 = c_ref[0]
        c2 = c_ref[1]
        x1 = x1_ref[0]                               # (h, ncw) - channels in lanes
        x2 = x2_ref[0]

        # --- separable Gaussian conv, all 5 operands & all packed channels ---
        # Row-stack the 5 operands -> single banded matmul against block-diag B,
        # then column-concat the 5 slabs -> single lane-dense matmul against A.
        stacked = jnp.concatenate(
            [x1, x2, x1 * x1, x2 * x2, x1 * x2], axis=0)              # (5h, ncw)
        t = jnp.dot(stacked.astype(band_dtype), b_ref[...],
                    preferred_element_type=jnp.float32)               # (5h, ncwout)
        t_cols = jnp.concatenate(
            [t[i * h:(i + 1) * h, :] for i in range(5)], axis=1)      # (h, 5*ncwout)
        conv = jnp.dot(a_ref[...], t_cols.astype(band_dtype),
                       preferred_element_type=jnp.float32)            # (hout, 5*ncwout)

        mu1 = conv[:, 0 * ncwout:1 * ncwout]
        mu2 = conv[:, 1 * ncwout:2 * ncwout]
        s11 = conv[:, 2 * ncwout:3 * ncwout]
        s22 = conv[:, 3 * ncwout:4 * ncwout]
        s12 = conv[:, 4 * ncwout:5 * ncwout]

        mu1_sq = mu1 * mu1
        mu2_sq = mu2 * mu2
        mu1_mu2 = mu1 * mu2
        sigma1_sq = s11 - mu1_sq
        sigma2_sq = s22 - mu2_sq
        sigma12 = s12 - mu1_mu2

        v1 = 2.0 * sigma12 + c2
        v2 = sigma1_sq + sigma2_sq + c2
        # Exact divisions (PyTorch parity); kernel is not VPU-bound here.
        cs_map = v1 / v2
        ssim_map = (2.0 * mu1_mu2 + c1) * v1 / ((mu1_sq + mu2_sq + c1) * v2)

        # Per-block partial sums, broadcast into a full (1,8,128) tile (dense store).
        ssim_ref[...] = jnp.full((1, 8, 128), jnp.sum(ssim_map), dtype=jnp.float32)
        cs_ref[...] = jnp.full((1, 8, 128), jnp.sum(cs_map), dtype=jnp.float32)

        if emit_pool:
            # Fused 2x2 average pooling of both images (2-way row stack) + range.
            st2 = jnp.concatenate([x1, x2], axis=0)                   # (2h, ncw)
            tp = jnp.dot(st2, ph_ref[...],
                         preferred_element_type=jnp.float32)          # (2h, ncw2)
            tp_cols = jnp.concatenate([tp[:h, :], tp[h:, :]], axis=1)  # (h, 2*ncw2)
            pooled = jnp.dot(pv_ref[...], tp_cols,
                             preferred_element_type=jnp.float32)      # (h2, 2*ncw2)
            p1 = pooled[:, :ncw2]
            p2 = pooled[:, ncw2:]
            p1_ref[0] = p1
            p2_ref[0] = p2
            mx_ref[...] = jnp.full((1, 8, 128), jnp.max(p1), dtype=jnp.float32)
            mn_ref[...] = jnp.full((1, 8, 128), jnp.min(p1), dtype=jnp.float32)

    smem_spec = pl.BlockSpec(memory_space=pltpu.MemorySpace.SMEM)
    part_shape = jax.ShapeDtypeStruct((nb, 8, 128), jnp.float32)
    part_spec = pl.BlockSpec((1, 8, 128), lambda b: (b, 0, 0))

    in_specs = [
        smem_spec,                                            # [C1, C2]
        pl.BlockSpec((hout, h), lambda b: (0, 0)),            # A (vertical taps)
        pl.BlockSpec((ncw, ncwout), lambda b: (0, 0)),        # block-diag B (horizontal taps)
    ]
    if emit_pool:
        in_specs += [
            pl.BlockSpec((h2, h), lambda b: (0, 0)),          # Pv (pool rows)
            pl.BlockSpec((ncw, ncw2), lambda b: (0, 0)),      # block-diag Ph (pool cols)
        ]
    in_specs += [
        pl.BlockSpec((1, h, ncw), lambda b: (b, 0, 0)),       # img1 channel-block slab
        pl.BlockSpec((1, h, ncw), lambda b: (b, 0, 0)),       # img2 channel-block slab
    ]

    out_shape = [part_shape, part_shape]                      # partial sum(ssim), sum(cs)
    out_specs = [part_spec, part_spec]
    if emit_pool:
        out_shape += [part_shape, part_shape,                 # partial max/min of pooled img1
                      jax.ShapeDtypeStruct((nb, h2, ncw2), jnp.float32),
                      jax.ShapeDtypeStruct((nb, h2, ncw2), jnp.float32)]
        out_specs += [part_spec, part_spec,
                      pl.BlockSpec((1, h2, ncw2), lambda b: (b, 0, 0)),
                      pl.BlockSpec((1, h2, ncw2), lambda b: (b, 0, 0))]

    return pl.pallas_call(
        kernel,
        grid=(nb,),
        in_specs=in_specs,
        out_specs=tuple(out_specs),
        out_shape=tuple(out_shape),
        compiler_params=pltpu.CompilerParams(
            # Per-block partial outputs -> channel-block axis is independent and
            # can shard across TensorCores (v7x megacore).
            dimension_semantics=("parallel",),
            # Headroom below v7x's 64 MiB physical VMEM; plenty on v5e/v6e.
            vmem_limit_bytes=48 * 1024 * 1024,
        ),
    )


def _c_constants(mx, mn):
    """Data-dependent dynamic range L (val_range=None branch of the reference)."""
    max_val = jnp.where(mx > 128.0, 255.0, 1.0)
    min_val = jnp.where(mn < -0.5, -1.0, 0.0)
    L = max_val - min_val
    return jnp.stack([(0.01 * L) ** 2, (0.03 * L) ** 2]).astype(jnp.float32)


def _avg_pool_packed(x, nc_blk, h, w):
    """avg_pool2d(2,2) on the lane-packed layout (nb, h, nc_blk*w)."""
    h2, w2 = h // 2, w // 2
    nb = x.shape[0]
    x = x.reshape(nb, h, nc_blk, w)[:, :2 * h2, :, :2 * w2]
    x = x.reshape(nb, h2, 2, nc_blk, w2, 2).mean(axis=(2, 5))
    return x.reshape(nb, h2, nc_blk * w2)


def _level_jnp(x1p, x2p, c1c2, nc_blk, h, w, wsz, emit_pool):
    """Tiny deep level computed with plain jnp (same packed layout / same math)."""
    a_m, b_m = _band_matrices(h, w, wsz)
    a_m = jnp.asarray(a_m)
    bblk = jnp.asarray(_block_diag(b_m, nc_blk))
    c1, c2 = c1c2[0], c1c2[1]

    def gconv(m):
        t = jnp.einsum('bhw,wx->bhx', m, bblk)
        return jnp.einsum('oh,bhx->box', a_m, t)

    mu1, mu2 = gconv(x1p), gconv(x2p)
    s11, s22, s12 = gconv(x1p * x1p), gconv(x2p * x2p), gconv(x1p * x2p)
    mu1_sq, mu2_sq, mu1_mu2 = mu1 * mu1, mu2 * mu2, mu1 * mu2
    sigma1_sq, sigma2_sq = s11 - mu1_sq, s22 - mu2_sq
    sigma12 = s12 - mu1_mu2
    v1 = 2.0 * sigma12 + c2
    v2 = sigma1_sq + sigma2_sq + c2
    cs = jnp.mean(v1 / v2)
    sim = jnp.mean((2.0 * mu1_mu2 + c1) * v1 / ((mu1_sq + mu2_sq + c1) * v2))
    pooled = None
    if emit_pool:
        pooled = (_avg_pool_packed(x1p, nc_blk, h, w),
                  _avg_pool_packed(x2p, nc_blk, h, w))
    return sim, cs, pooled


def msssim(img1, img2, window_size=11, size_average=True, normalize=True):
    n, ch, h, w = img1.shape
    nc = n * ch
    x1 = img1.reshape(nc, h, w).astype(jnp.float32)
    x2 = img2.reshape(nc, h, w).astype(jnp.float32)

    band_itemsize = 2 if min(h, w) >= _BF16_MIN_HW else 4
    nc_blk = _pick_nc_blk(nc, h, w, min(window_size, h, w), band_itemsize)
    nb = nc // nc_blk

    # Lane-packed channel layout (nb, h, nc_blk*w); the Pallas levels keep this
    # layout end to end (pooled outputs come back already packed).
    def pack(x):
        return x.reshape(nb, nc_blk, h, w).transpose(0, 2, 1, 3).reshape(nb, h, nc_blk * w)

    x1p, x2p = pack(x1), pack(x2)

    # Level-0 dynamic range; deeper levels reuse the pooled max/min that the
    # level computation produces (no extra full HBM pass over img1 per level).
    mx = jnp.max(x1)
    mn = jnp.min(x1)

    weights = jnp.asarray(WEIGHTS)
    levels = int(WEIGHTS.shape[0])
    mssim_list, mcs_list = [], []
    cur_h, cur_w = h, w

    for lvl in range(levels):
        wsz = min(window_size, cur_h, cur_w)
        hout, wout = cur_h - wsz + 1, cur_w - wsz + 1
        emit_pool = lvl < levels - 1  # pooled result after the last level is unused
        c1c2 = _c_constants(mx, mn)

        if min(cur_h, cur_w) >= _MIN_PALLAS_HW:
            # ------------------------- Pallas level -------------------------
            lvl_dtype = jnp.bfloat16 if min(cur_h, cur_w) >= _BF16_MIN_HW else jnp.float32
            a_m, b_m = _band_matrices(cur_h, cur_w, wsz)
            bblk = _block_diag(b_m, nc_blk)
            args = [c1c2,
                    jnp.asarray(a_m, dtype=lvl_dtype),
                    jnp.asarray(bblk, dtype=lvl_dtype)]
            if emit_pool:
                pv, ph = _pool_matrices(cur_h, cur_w)
                args += [jnp.asarray(pv), jnp.asarray(_block_diag(ph, nc_blk))]
            args += [x1p, x2p]

            outs = _make_level_call(nb, nc_blk, cur_h, cur_w, wsz, emit_pool,
                                    jnp.dtype(lvl_dtype).name)(*args)
            if emit_pool:
                ssim_p, cs_p, mx_p, mn_p, p1, p2 = outs
                mx = jnp.max(mx_p[:, 0, 0])
                mn = jnp.min(mn_p[:, 0, 0])
                x1p, x2p = p1, p2
            else:
                ssim_p, cs_p = outs
            inv_count = 1.0 / float(nc * hout * wout)
            mssim_list.append(jnp.sum(ssim_p[:, 0, 0]) * inv_count)
            mcs_list.append(jnp.sum(cs_p[:, 0, 0]) * inv_count)
        else:
            # ------- tiny deep level: plain jnp (fused by XLA, no launch) -------
            sim, cs, pooled = _level_jnp(x1p, x2p, c1c2, nc_blk, cur_h, cur_w, wsz, emit_pool)
            mssim_list.append(sim)
            mcs_list.append(cs)
            if emit_pool:
                p1, p2 = pooled
                mx, mn = jnp.max(p1), jnp.min(p1)
                x1p, x2p = p1, p2

        if emit_pool:
            cur_h, cur_w = cur_h // 2, cur_w // 2

    mssim_v = jnp.stack(mssim_list)
    mcs_v = jnp.stack(mcs_list)
    if normalize:
        mssim_v = (mssim_v + 1.0) / 2.0
        mcs_v = (mcs_v + 1.0) / 2.0

    pow1 = mcs_v ** weights
    pow2 = mssim_v ** weights
    # output = prod(pow1[:-1] * pow2[-1])  (exactly as in the reference)
    return jnp.prod(pow1[:-1] * pow2[-1])


class MSSSIM:
    """JAX/Pallas port of the PyTorch MSSSIM loss module (forward only)."""

    def __init__(self, window_size=11, size_average=True, channel=3):
        self.window_size = window_size
        self.size_average = size_average
        self.channel = channel  # unused in forward (window built per-input), kept for parity
        self._fn = jax.jit(functools.partial(
            msssim, window_size=window_size, size_average=size_average, normalize=True))

    def __call__(self, img1, img2):
        return self._fn(img1, img2)


if __name__ == "__main__":
    key = jax.random.PRNGKey(0)
    k1, k2 = jax.random.split(key)
    # Small NCHW images; 32x32 keeps all 5 pyramid levels valid (32->16->8->4->2).
    img1 = jax.random.uniform(k1, (2, 3, 32, 32), dtype=jnp.float32)
    img2 = jax.random.uniform(k2, (2, 3, 32, 32), dtype=jnp.float32)

    loss_fn = MSSSIM(window_size=11, size_average=True, channel=3)
    out = jax.block_until_ready(loss_fn(img1, img2))
    assert out.shape == () and bool(jnp.isfinite(out))
    print("KERNEL_OK")
</pallas_src>

<mosaic_0001>
module attributes {stable_mosaic.version = 11 : i64} {
  func.func @kernel(%arg0: i32, %arg1: memref<2xf32, #tpu.memory_space<smem>>, %arg2: memref<22x32xf32, #tpu.memory_space<vmem>>, %arg3: memref<192x132xf32, #tpu.memory_space<vmem>>, %arg4: memref<16x32xf32, #tpu.memory_space<vmem>>, %arg5: memref<192x96xf32, #tpu.memory_space<vmem>>, %arg6: memref<1x32x192xf32, #tpu.memory_space<vmem>>, %arg7: memref<1x32x192xf32, #tpu.memory_space<vmem>>, %arg8: memref<1x8x128xf32, #tpu.memory_space<vmem>>, %arg9: memref<1x8x128xf32, #tpu.memory_space<vmem>>, %arg10: memref<1x8x128xf32, #tpu.memory_space<vmem>>, %arg11: memref<1x8x128xf32, #tpu.memory_space<vmem>>, %arg12: memref<1x16x96xf32, #tpu.memory_space<vmem>>, %arg13: memref<1x16x96xf32, #tpu.memory_space<vmem>>) attributes {dimension_semantics = [#tpu.dimension_semantics<parallel>], iteration_bounds = array<i64: 1>, scalar_prefetch = 0 : i64, scratch_operands = 0 : i64, tpu.core_type = #tpu.core_type<tc>, window_params = [{transform_indices = @transform_0, window_bounds = array<i64: 2>}, {pipeline_mode = #tpu.pipeline_mode<synchronous>, transform_indices = @transform_1, window_bounds = array<i64: 22, 32>}, {pipeline_mode = #tpu.pipeline_mode<synchronous>, transform_indices = @transform_2, window_bounds = array<i64: 192, 132>}, {pipeline_mode = #tpu.pipeline_mode<synchronous>, transform_indices = @transform_3, window_bounds = array<i64: 16, 32>}, {pipeline_mode = #tpu.pipeline_mode<synchronous>, transform_indices = @transform_4, window_bounds = array<i64: 192, 96>}, {transform_indices = @transform_5, window_bounds = array<i64: 1, 32, 192>}, {transform_indices = @transform_6, window_bounds = array<i64: 1, 32, 192>}, {transform_indices = @transform_7, window_bounds = array<i64: 1, 8, 128>}, {transform_indices = @transform_8, window_bounds = array<i64: 1, 8, 128>}, {transform_indices = @transform_9, window_bounds = array<i64: 1, 8, 128>}, {transform_indices = @transform_10, window_bounds = array<i64: 1, 8, 128>}, {transform_indices = @transform_11, window_bounds = array<i64: 1, 16, 96>}, {transform_indices = @transform_12, window_bounds = array<i64: 1, 16, 96>}]} {
    %c0 = arith.constant 0 : index
    %0 = memref.load %arg1[%c0] : memref<2xf32, #tpu.memory_space<smem>>
    %c1 = arith.constant 1 : index
    %1 = memref.load %arg1[%c1] : memref<2xf32, #tpu.memory_space<smem>>
    %c0_0 = arith.constant 0 : index
    %c0_1 = arith.constant 0 : index
    %c0_2 = arith.constant 0 : index
    %2 = vector.load %arg6[%c0_0, %c0_1, %c0_2] : memref<1x32x192xf32, #tpu.memory_space<vmem>>, vector<1x32x192xf32>
    %3 = vector.shape_cast %2 : vector<1x32x192xf32> to vector<32x192xf32>
    %c0_3 = arith.constant 0 : index
    %c0_4 = arith.constant 0 : index
    %c0_5 = arith.constant 0 : index
    %4 = vector.load %arg7[%c0_3, %c0_4, %c0_5] : memref<1x32x192xf32, #tpu.memory_space<vmem>>, vector<1x32x192xf32>
    %5 = vector.shape_cast %4 : vector<1x32x192xf32> to vector<32x192xf32>
    %6 = arith.mulf %3, %3 : vector<32x192xf32>
    %7 = arith.mulf %5, %5 : vector<32x192xf32>
    %8 = arith.mulf %3, %5 : vector<32x192xf32>
    %9 = tpu.concatenate %3, %5, %6, %7, %8 in 0 : vector<32x192xf32>, vector<32x192xf32>, vector<32x192xf32>, vector<32x192xf32>, vector<32x192xf32> -> vector<160x192xf32>
    %c0_6 = arith.constant 0 : index
    %c0_7 = arith.constant 0 : index
    %10 = vector.load %arg3[%c0_6, %c0_7] : memref<192x132xf32, #tpu.memory_space<vmem>>, vector<192x132xf32>
    %cst = arith.constant dense<0.000000e+00> : vector<160x132xf32>
    %11 = tpu.matmul %9, %10, %cst {dimension_numbers = #tpu.dot_dimension_numbers<[1], [0], [0], [1], [0, 0, 1, 1], [], []>} : vector<160x192xf32>, vector<192x132xf32>, vector<160x132xf32> -> vector<160x132xf32>
    %12 = vector.extract_strided_slice %11 {offsets = [0, 0], sizes = [32, 132], strides = [1, 1]} : vector<160x132xf32> to vector<32x132xf32>
    %13 = vector.extract_strided_slice %11 {offsets = [32, 0], sizes = [32, 132], strides = [1, 1]} : vector<160x132xf32> to vector<32x132xf32>
    %14 = vector.extract_strided_slice %11 {offsets = [64, 0], sizes = [32, 132], strides = [1, 1]} : vector<160x132xf32> to vector<32x132xf32>
    %15 = vector.extract_strided_slice %11 {offsets = [96, 0], sizes = [32, 132], strides = [1, 1]} : vector<160x132xf32> to vector<32x132xf32>
    %16 = vector.extract_strided_slice %11 {offsets = [128, 0], sizes = [32, 132], strides = [1, 1]} : vector<160x132xf32> to vector<32x132xf32>
    %17 = tpu.concatenate %12, %13, %14, %15, %16 in 1 : vector<32x132xf32>, vector<32x132xf32>, vector<32x132xf32>, vector<32x132xf32>, vector<32x132xf32> -> vector<32x660xf32>
    %c0_8 = arith.constant 0 : index
    %c0_9 = arith.constant 0 : index
    %18 = vector.load %arg2[%c0_8, %c0_9] : memref<22x32xf32, #tpu.memory_space<vmem>>, vector<22x32xf32>
    %cst_10 = arith.constant dense<0.000000e+00> : vector<22x660xf32>
    %19 = tpu.matmul %18, %17, %cst_10 {dimension_numbers = #tpu.dot_dimension_numbers<[1], [0], [0], [1], [0, 0, 1, 1], [], []>} : vector<22x32xf32>, vector<32x660xf32>, vector<22x660xf32> -> vector<22x660xf32>
    %20 = vector.extract_strided_slice %19 {offsets = [0, 0], sizes = [22, 132], strides = [1, 1]} : vector<22x660xf32> to vector<22x132xf32>
    %21 = vector.extract_strided_slice %19 {offsets = [0, 132], sizes = [22, 132], strides = [1, 1]} : vector<22x660xf32> to vector<22x132xf32>
    %22 = vector.extract_strided_slice %19 {offsets = [0, 264], sizes = [22, 132], strides = [1, 1]} : vector<22x660xf32> to vector<22x132xf32>
    %23 = vector.extract_strided_slice %19 {offsets = [0, 396], sizes = [22, 132], strides = [1, 1]} : vector<22x660xf32> to vector<22x132xf32>
    %24 = vector.extract_strided_slice %19 {offsets = [0, 528], sizes = [22, 132], strides = [1, 1]} : vector<22x660xf32> to vector<22x132xf32>
    %25 = arith.mulf %20, %20 : vector<22x132xf32>
    %26 = arith.mulf %21, %21 : vector<22x132xf32>
    %27 = arith.mulf %20, %21 : vector<22x132xf32>
    %28 = arith.subf %22, %25 : vector<22x132xf32>
    %29 = arith.subf %23, %26 : vector<22x132xf32>
    %30 = arith.subf %24, %27 : vector<22x132xf32>
    %cst_11 = arith.constant 2.000000e+00 : f32
    %31 = vector.broadcast %cst_11 : f32 to vector<22x132xf32>
    %32 = arith.mulf %31, %30 : vector<22x132xf32>
    %33 = vector.broadcast %1 : f32 to vector<22x132xf32>
    %34 = arith.addf %32, %33 : vector<22x132xf32>
    %35 = arith.addf %28, %29 : vector<22x132xf32>
    %36 = vector.broadcast %1 : f32 to vector<22x132xf32>
    %37 = arith.addf %35, %36 : vector<22x132xf32>
    %38 = arith.divf %34, %37 : vector<22x132xf32>
    %cst_12 = arith.constant 2.000000e+00 : f32
    %39 = vector.broadcast %cst_12 : f32 to vector<22x132xf32>
    %40 = arith.mulf %39, %27 : vector<22x132xf32>
    %41 = vector.broadcast %0 : f32 to vector<22x132xf32>
    %42 = arith.addf %40, %41 : vector<22x132xf32>
    %43 = arith.mulf %42, %34 : vector<22x132xf32>
    %44 = arith.addf %25, %26 : vector<22x132xf32>
    %45 = vector.broadcast %0 : f32 to vector<22x132xf32>
    %46 = arith.addf %44, %45 : vector<22x132xf32>
    %47 = arith.mulf %46, %37 : vector<22x132xf32>
    %48 = arith.divf %43, %47 : vector<22x132xf32>
    %49 = vector.shape_cast %48 : vector<22x132xf32> to vector<1x22x132xf32>
    %cst_13 = arith.constant dense<0.000000e+00> : vector<1xf32>
    %50 = vector.multi_reduction <add>, %49, %cst_13 [1, 2] : vector<1x22x132xf32> to vector<1xf32>
    %51 = vector.shape_cast %50 : vector<1xf32> to vector<1x1x1xf32>
    %52 = vector.extract %51[0, 0, 0] : f32 from vector<1x1x1xf32>
    %53 = vector.broadcast %52 : f32 to vector<1x8x128xf32>
    %c0_14 = arith.constant 0 : index
    %c0_15 = arith.constant 0 : index
    %c0_16 = arith.constant 0 : index
    %54 = vector.load %arg8[%c0_14, %c0_15, %c0_16] : memref<1x8x128xf32, #tpu.memory_space<vmem>>, vector<1x8x128xf32>
    tpu.vector_store %arg8[%c0_14, %c0_15, %c0_16], %53 {strides = array<i32>} : memref<1x8x128xf32, #tpu.memory_space<vmem>>, vector<1x8x128xf32>,
    %55 = vector.shape_cast %38 : vector<22x132xf32> to vector<1x22x132xf32>
    %cst_17 = arith.constant dense<0.000000e+00> : vector<1xf32>
    %56 = vector.multi_reduction <add>, %55, %cst_17 [1, 2] : vector<1x22x132xf32> to vector<1xf32>
    %57 = vector.shape_cast %56 : vector<1xf32> to vector<1x1x1xf32>
    %58 = vector.extract %57[0, 0, 0] : f32 from vector<1x1x1xf32>
    %59 = vector.broadcast %58 : f32 to vector<1x8x128xf32>
    %c0_18 = arith.constant 0 : index
    %c0_19 = arith.constant 0 : index
    %c0_20 = arith.constant 0 : index
    %60 = vector.load %arg9[%c0_18, %c0_19, %c0_20] : memref<1x8x128xf32, #tpu.memory_space<vmem>>, vector<1x8x128xf32>
    tpu.vector_store %arg9[%c0_18, %c0_19, %c0_20], %59 {strides = array<i32>} : memref<1x8x128xf32, #tpu.memory_space<vmem>>, vector<1x8x128xf32>,
    %61 = tpu.concatenate %3, %5 in 0 : vector<32x192xf32>, vector<32x192xf32> -> vector<64x192xf32>
    %c0_21 = arith.constant 0 : index
    %c0_22 = arith.constant 0 : index
    %62 = vector.load %arg5[%c0_21, %c0_22] : memref<192x96xf32, #tpu.memory_space<vmem>>, vector<192x96xf32>
    %cst_23 = arith.constant dense<0.000000e+00> : vector<64x96xf32>
    %63 = tpu.matmul %61, %62, %cst_23 {dimension_numbers = #tpu.dot_dimension_numbers<[1], [0], [0], [1], [0, 0, 1, 1], [], []>} : vector<64x192xf32>, vector<192x96xf32>, vector<64x96xf32> -> vector<64x96xf32>
    %64 = vector.extract_strided_slice %63 {offsets = [0, 0], sizes = [32, 96], strides = [1, 1]} : vector<64x96xf32> to vector<32x96xf32>
    %65 = vector.extract_strided_slice %63 {offsets = [32, 0], sizes = [32, 96], strides = [1, 1]} : vector<64x96xf32> to vector<32x96xf32>
    %66 = tpu.concatenate %64, %65 in 1 : vector<32x96xf32>, vector<32x96xf32> -> vector<32x192xf32>
    %c0_24 = arith.constant 0 : index
    %c0_25 = arith.constant 0 : index
    %67 = vector.load %arg4[%c0_24, %c0_25] : memref<16x32xf32, #tpu.memory_space<vmem>>, vector<16x32xf32>
    %cst_26 = arith.constant dense<0.000000e+00> : vector<16x192xf32>
    %68 = tpu.matmul %67, %66, %cst_26 {dimension_numbers = #tpu.dot_dimension_numbers<[1], [0], [0], [1], [0, 0, 1, 1], [], []>} : vector<16x32xf32>, vector<32x192xf32>, vector<16x192xf32> -> vector<16x192xf32>
    %69 = vector.extract_strided_slice %68 {offsets = [0, 0], sizes = [16, 96], strides = [1, 1]} : vector<16x192xf32> to vector<16x96xf32>
    %70 = vector.extract_strided_slice %68 {offsets = [0, 96], sizes = [16, 96], strides = [1, 1]} : vector<16x192xf32> to vector<16x96xf32>
    %c0_27 = arith.constant 0 : index
    %c0_28 = arith.constant 0 : index
    %c0_29 = arith.constant 0 : index
    %71 = vector.load %arg12[%c0_27, %c0_28, %c0_29] : memref<1x16x96xf32, #tpu.memory_space<vmem>>, vector<1x16x96xf32>
    %72 = vector.shape_cast %71 : vector<1x16x96xf32> to vector<16x96xf32>
    %73 = vector.shape_cast %69 : vector<16x96xf32> to vector<1x16x96xf32>
    tpu.vector_store %arg12[%c0_27, %c0_28, %c0_29], %73 {strides = array<i32>} : memref<1x16x96xf32, #tpu.memory_space<vmem>>, vector<1x16x96xf32>,
    %c0_30 = arith.constant 0 : index
    %c0_31 = arith.constant 0 : index
    %c0_32 = arith.constant 0 : index
    %74 = vector.load %arg13[%c0_30, %c0_31, %c0_32] : memref<1x16x96xf32, #tpu.memory_space<vmem>>, vector<1x16x96xf32>
    %75 = vector.shape_cast %74 : vector<1x16x96xf32> to vector<16x96xf32>
    %76 = vector.shape_cast %70 : vector<16x96xf32> to vector<1x16x96xf32>
    tpu.vector_store %arg13[%c0_30, %c0_31, %c0_32], %76 {strides = array<i32>} : memref<1x16x96xf32, #tpu.memory_space<vmem>>, vector<1x16x96xf32>,
    %77 = vector.shape_cast %69 : vector<16x96xf32> to vector<1x16x96xf32>
    %cst_33 = arith.constant dense<0xFF800000> : vector<1xf32>
    %78 = vector.multi_reduction <maximumf>, %77, %cst_33 [1, 2] : vector<1x16x96xf32> to vector<1xf32>
    %79 = vector.shape_cast %78 : vector<1xf32> to vector<1x1x1xf32>
    %80 = vector.extract %79[0, 0, 0] : f32 from vector<1x1x1xf32>
    %81 = vector.broadcast %80 : f32 to vector<1x8x128xf32>
    %c0_34 = arith.constant 0 : index
    %c0_35 = arith.constant 0 : index
    %c0_36 = arith.constant 0 : index
    %82 = vector.load %arg10[%c0_34, %c0_35, %c0_36] : memref<1x8x128xf32, #tpu.memory_space<vmem>>, vector<1x8x128xf32>
    tpu.vector_store %arg10[%c0_34, %c0_35, %c0_36], %81 {strides = array<i32>} : memref<1x8x128xf32, #tpu.memory_space<vmem>>, vector<1x8x128xf32>,
    %83 = vector.shape_cast %69 : vector<16x96xf32> to vector<1x16x96xf32>
    %cst_37 = arith.constant dense<0x7F800000> : vector<1xf32>
    %84 = vector.multi_reduction <minimumf>, %83, %cst_37 [1, 2] : vector<1x16x96xf32> to vector<1xf32>
    %85 = vector.shape_cast %84 : vector<1xf32> to vector<1x1x1xf32>
    %86 = vector.extract %85[0, 0, 0] : f32 from vector<1x1x1xf32>
    %87 = vector.broadcast %86 : f32 to vector<1x8x128xf32>
    %c0_38 = arith.constant 0 : index
    %c0_39 = arith.constant 0 : index
    %c0_40 = arith.constant 0 : index
    %88 = vector.load %arg11[%c0_38, %c0_39, %c0_40] : memref<1x8x128xf32, #tpu.memory_space<vmem>>, vector<1x8x128xf32>
    tpu.vector_store %arg11[%c0_38, %c0_39, %c0_40], %87 {strides = array<i32>} : memref<1x8x128xf32, #tpu.memory_space<vmem>>, vector<1x8x128xf32>,
    return
  }
  func.func @transform_0(%arg0: i32) -> i32 {
    %c0_i32 = arith.constant 0 : i32
    %c0_i32_0 = arith.constant 0 : i32
    return %c0_i32 : i32
  }
  func.func @transform_1(%arg0: i32) -> (i32, i32) {
    %c0_i32 = arith.constant 0 : i32
    %c0_i32_0 = arith.constant 0 : i32
    %c0_i32_1 = arith.constant 0 : i32
    return %c0_i32, %c0_i32_0 : i32, i32
  }
  func.func @transform_2(%arg0: i32) -> (i32, i32) {
    %c0_i32 = arith.constant 0 : i32
    %c0_i32_0 = arith.constant 0 : i32
    %c0_i32_1 = arith.constant 0 : i32
    return %c0_i32, %c0_i32_0 : i32, i32
  }
  func.func @transform_3(%arg0: i32) -> (i32, i32) {
    %c0_i32 = arith.constant 0 : i32
    %c0_i32_0 = arith.constant 0 : i32
    %c0_i32_1 = arith.constant 0 : i32
    return %c0_i32, %c0_i32_0 : i32, i32
  }
  func.func @transform_4(%arg0: i32) -> (i32, i32) {
    %c0_i32 = arith.constant 0 : i32
    %c0_i32_0 = arith.constant 0 : i32
    %c0_i32_1 = arith.constant 0 : i32
    return %c0_i32, %c0_i32_0 : i32, i32
  }
  func.func @transform_5(%arg0: i32) -> (i32, i32, i32) {
    %c0_i32 = arith.constant 0 : i32
    %c0_i32_0 = arith.constant 0 : i32
    %c0_i32_1 = arith.constant 0 : i32
    return %arg0, %c0_i32, %c0_i32_0 : i32, i32, i32
  }
  func.func @transform_6(%arg0: i32) -> (i32, i32, i32) {
    %c0_i32 = arith.constant 0 : i32
    %c0_i32_0 = arith.constant 0 : i32
    %c0_i32_1 = arith.constant 0 : i32
    return %arg0, %c0_i32, %c0_i32_0 : i32, i32, i32
  }
  func.func @transform_7(%arg0: i32) -> (i32, i32, i32) {
    %c0_i32 = arith.constant 0 : i32
    %c0_i32_0 = arith.constant 0 : i32
    %c0_i32_1 = arith.constant 0 : i32
    return %arg0, %c0_i32, %c0_i32_0 : i32, i32, i32
  }
  func.func @transform_8(%arg0: i32) -> (i32, i32, i32) {
    %c0_i32 = arith.constant 0 : i32
    %c0_i32_0 = arith.constant 0 : i32
    %c0_i32_1 = arith.constant 0 : i32
    return %arg0, %c0_i32, %c0_i32_0 : i32, i32, i32
  }
  func.func @transform_9(%arg0: i32) -> (i32, i32, i32) {
    %c0_i32 = arith.constant 0 : i32
    %c0_i32_0 = arith.constant 0 : i32
    %c0_i32_1 = arith.constant 0 : i32
    return %arg0, %c0_i32, %c0_i32_0 : i32, i32, i32
  }
  func.func @transform_10(%arg0: i32) -> (i32, i32, i32) {
    %c0_i32 = arith.constant 0 : i32
    %c0_i32_0 = arith.constant 0 : i32
    %c0_i32_1 = arith.constant 0 : i32
    return %arg0, %c0_i32, %c0_i32_0 : i32, i32, i32
  }
  func.func @transform_11(%arg0: i32) -> (i32, i32, i32) {
    %c0_i32 = arith.constant 0 : i32
    %c0_i32_0 = arith.constant 0 : i32
    %c0_i32_1 = arith.constant 0 : i32
    return %arg0, %c0_i32, %c0_i32_0 : i32, i32, i32
  }
  func.func @transform_12(%arg0: i32) -> (i32, i32, i32) {
    %c0_i32 = arith.constant 0 : i32
    %c0_i32_0 = arith.constant 0 : i32
    %c0_i32_1 = arith.constant 0 : i32
    return %arg0, %c0_i32, %c0_i32_0 : i32, i32, i32
  }
}

module attributes {stable_mosaic.version = 11 : i64} {
  func.func @kernel(%arg0: i32, %arg1: memref<2xf32, #tpu.memory_space<smem>>, %arg2: memref<6x16xf32, #tpu.memory_space<vmem>>, %arg3: memref<96x36xf32, #tpu.memory_space<vmem>>, %arg4: memref<8x16xf32, #tpu.memory_space<vmem>>, %arg5: memref<96x48xf32, #tpu.memory_space<vmem>>, %arg6: memref<1x16x96xf32, #tpu.memory_space<vmem>>, %arg7: memref<1x16x96xf32, #tpu.memory_space<vmem>>, %arg8: memref<1x8x128xf32, #tpu.memory_space<vmem>>, %arg9: memref<1x8x128xf32, #tpu.memory_space<vmem>>, %arg10: memref<1x8x128xf32, #tpu.memory_space<vmem>>, %arg11: memref<1x8x128xf32, #tpu.memory_space<vmem>>, %arg12: memref<1x8x48xf32, #tpu.memory_space<vmem>>, %arg13: memref<1x8x48xf32, #tpu.memory_space<vmem>>) attributes {dimension_semantics = [#tpu.dimension_semantics<parallel>], iteration_bounds = array<i64: 1>, scalar_prefetch = 0 : i64, scratch_operands = 0 : i64, tpu.core_type = #tpu.core_type<tc>, window_params = [{transform_indices = @transform_0, window_bounds = array<i64: 2>}, {pipeline_mode = #tpu.pipeline_mode<synchronous>, transform_indices = @transform_1, window_bounds = array<i64: 6, 16>}, {pipeline_mode = #tpu.pipeline_mode<synchronous>, transform_indices = @transform_2, window_bounds = array<i64: 96, 36>}, {pipeline_mode = #tpu.pipeline_mode<synchronous>, transform_indices = @transform_3, window_bounds = array<i64: 8, 16>}, {pipeline_mode = #tpu.pipeline_mode<synchronous>, transform_indices = @transform_4, window_bounds = array<i64: 96, 48>}, {transform_indices = @transform_5, window_bounds = array<i64: 1, 16, 96>}, {transform_indices = @transform_6, window_bounds = array<i64: 1, 16, 96>}, {transform_indices = @transform_7, window_bounds = array<i64: 1, 8, 128>}, {transform_indices = @transform_8, window_bounds = array<i64: 1, 8, 128>}, {transform_indices = @transform_9, window_bounds = array<i64: 1, 8, 128>}, {transform_indices = @transform_10, window_bounds = array<i64: 1, 8, 128>}, {transform_indices = @transform_11, window_bounds = array<i64: 1, 8, 48>}, {transform_indices = @transform_12, window_bounds = array<i64: 1, 8, 48>}]} {
    %c0 = arith.constant 0 : index
    %0 = memref.load %arg1[%c0] : memref<2xf32, #tpu.memory_space<smem>>
    %c1 = arith.constant 1 : index
    %1 = memref.load %arg1[%c1] : memref<2xf32, #tpu.memory_space<smem>>
    %c0_0 = arith.constant 0 : index
    %c0_1 = arith.constant 0 : index
    %c0_2 = arith.constant 0 : index
    %2 = vector.load %arg6[%c0_0, %c0_1, %c0_2] : memref<1x16x96xf32, #tpu.memory_space<vmem>>, vector<1x16x96xf32>
    %3 = vector.shape_cast %2 : vector<1x16x96xf32> to vector<16x96xf32>
    %c0_3 = arith.constant 0 : index
    %c0_4 = arith.constant 0 : index
    %c0_5 = arith.constant 0 : index
    %4 = vector.load %arg7[%c0_3, %c0_4, %c0_5] : memref<1x16x96xf32, #tpu.memory_space<vmem>>, vector<1x16x96xf32>
    %5 = vector.shape_cast %4 : vector<1x16x96xf32> to vector<16x96xf32>
    %6 = arith.mulf %3, %3 : vector<16x96xf32>
    %7 = arith.mulf %5, %5 : vector<16x96xf32>
    %8 = arith.mulf %3, %5 : vector<16x96xf32>
    %9 = tpu.concatenate %3, %5, %6, %7, %8 in 0 : vector<16x96xf32>, vector<16x96xf32>, vector<16x96xf32>, vector<16x96xf32>, vector<16x96xf32> -> vector<80x96xf32>
    %c0_6 = arith.constant 0 : index
    %c0_7 = arith.constant 0 : index
    %10 = vector.load %arg3[%c0_6, %c0_7] : memref<96x36xf32, #tpu.memory_space<vmem>>, vector<96x36xf32>
    %cst = arith.constant dense<0.000000e+00> : vector<80x36xf32>
    %11 = tpu.matmul %9, %10, %cst {dimension_numbers = #tpu.dot_dimension_numbers<[1], [0], [0], [1], [0, 0, 1, 1], [], []>} : vector<80x96xf32>, vector<96x36xf32>, vector<80x36xf32> -> vector<80x36xf32>
    %12 = vector.extract_strided_slice %11 {offsets = [0, 0], sizes = [16, 36], strides = [1, 1]} : vector<80x36xf32> to vector<16x36xf32>
    %13 = vector.extract_strided_slice %11 {offsets = [16, 0], sizes = [16, 36], strides = [1, 1]} : vector<80x36xf32> to vector<16x36xf32>
    %14 = vector.extract_strided_slice %11 {offsets = [32, 0], sizes = [16, 36], strides = [1, 1]} : vector<80x36xf32> to vector<16x36xf32>
    %15 = vector.extract_strided_slice %11 {offsets = [48, 0], sizes = [16, 36], strides = [1, 1]} : vector<80x36xf32> to vector<16x36xf32>
    %16 = vector.extract_strided_slice %11 {offsets = [64, 0], sizes = [16, 36], strides = [1, 1]} : vector<80x36xf32> to vector<16x36xf32>
    %17 = tpu.concatenate %12, %13, %14, %15, %16 in 1 : vector<16x36xf32>, vector<16x36xf32>, vector<16x36xf32>, vector<16x36xf32>, vector<16x36xf32> -> vector<16x180xf32>
    %c0_8 = arith.constant 0 : index
    %c0_9 = arith.constant 0 : index
    %18 = vector.load %arg2[%c0_8, %c0_9] : memref<6x16xf32, #tpu.memory_space<vmem>>, vector<6x16xf32>
    %cst_10 = arith.constant dense<0.000000e+00> : vector<6x180xf32>
    %19 = tpu.matmul %18, %17, %cst_10 {dimension_numbers = #tpu.dot_dimension_numbers<[1], [0], [0], [1], [0, 0, 1, 1], [], []>} : vector<6x16xf32>, vector<16x180xf32>, vector<6x180xf32> -> vector<6x180xf32>
    %20 = vector.extract_strided_slice %19 {offsets = [0, 0], sizes = [6, 36], strides = [1, 1]} : vector<6x180xf32> to vector<6x36xf32>
    %21 = vector.extract_strided_slice %19 {offsets = [0, 36], sizes = [6, 36], strides = [1, 1]} : vector<6x180xf32> to vector<6x36xf32>
    %22 = vector.extract_strided_slice %19 {offsets = [0, 72], sizes = [6, 36], strides = [1, 1]} : vector<6x180xf32> to vector<6x36xf32>
    %23 = vector.extract_strided_slice %19 {offsets = [0, 108], sizes = [6, 36], strides = [1, 1]} : vector<6x180xf32> to vector<6x36xf32>
    %24 = vector.extract_strided_slice %19 {offsets = [0, 144], sizes = [6, 36], strides = [1, 1]} : vector<6x180xf32> to vector<6x36xf32>
    %25 = arith.mulf %20, %20 : vector<6x36xf32>
    %26 = arith.mulf %21, %21 : vector<6x36xf32>
    %27 = arith.mulf %20, %21 : vector<6x36xf32>
    %28 = arith.subf %22, %25 : vector<6x36xf32>
    %29 = arith.subf %23, %26 : vector<6x36xf32>
    %30 = arith.subf %24, %27 : vector<6x36xf32>
    %cst_11 = arith.constant 2.000000e+00 : f32
    %31 = vector.broadcast %cst_11 : f32 to vector<6x36xf32>
    %32 = arith.mulf %31, %30 : vector<6x36xf32>
    %33 = vector.broadcast %1 : f32 to vector<6x36xf32>
    %34 = arith.addf %32, %33 : vector<6x36xf32>
    %35 = arith.addf %28, %29 : vector<6x36xf32>
    %36 = vector.broadcast %1 : f32 to vector<6x36xf32>
    %37 = arith.addf %35, %36 : vector<6x36xf32>
    %38 = arith.divf %34, %37 : vector<6x36xf32>
    %cst_12 = arith.constant 2.000000e+00 : f32
    %39 = vector.broadcast %cst_12 : f32 to vector<6x36xf32>
    %40 = arith.mulf %39, %27 : vector<6x36xf32>
    %41 = vector.broadcast %0 : f32 to vector<6x36xf32>
    %42 = arith.addf %40, %41 : vector<6x36xf32>
    %43 = arith.mulf %42, %34 : vector<6x36xf32>
    %44 = arith.addf %25, %26 : vector<6x36xf32>
    %45 = vector.broadcast %0 : f32 to vector<6x36xf32>
    %46 = arith.addf %44, %45 : vector<6x36xf32>
    %47 = arith.mulf %46, %37 : vector<6x36xf32>
    %48 = arith.divf %43, %47 : vector<6x36xf32>
    %49 = vector.shape_cast %48 : vector<6x36xf32> to vector<1x6x36xf32>
    %cst_13 = arith.constant dense<0.000000e+00> : vector<1xf32>
    %50 = vector.multi_reduction <add>, %49, %cst_13 [1, 2] : vector<1x6x36xf32> to vector<1xf32>
    %51 = vector.shape_cast %50 : vector<1xf32> to vector<1x1x1xf32>
    %52 = vector.extract %51[0, 0, 0] : f32 from vector<1x1x1xf32>
    %53 = vector.broadcast %52 : f32 to vector<1x8x128xf32>
    %c0_14 = arith.constant 0 : index
    %c0_15 = arith.constant 0 : index
    %c0_16 = arith.constant 0 : index
    %54 = vector.load %arg8[%c0_14, %c0_15, %c0_16] : memref<1x8x128xf32, #tpu.memory_space<vmem>>, vector<1x8x128xf32>
    tpu.vector_store %arg8[%c0_14, %c0_15, %c0_16], %53 {strides = array<i32>} : memref<1x8x128xf32, #tpu.memory_space<vmem>>, vector<1x8x128xf32>,
    %55 = vector.shape_cast %38 : vector<6x36xf32> to vector<1x6x36xf32>
    %cst_17 = arith.constant dense<0.000000e+00> : vector<1xf32>
    %56 = vector.multi_reduction <add>, %55, %cst_17 [1, 2] : vector<1x6x36xf32> to vector<1xf32>
    %57 = vector.shape_cast %56 : vector<1xf32> to vector<1x1x1xf32>
    %58 = vector.extract %57[0, 0, 0] : f32 from vector<1x1x1xf32>
    %59 = vector.broadcast %58 : f32 to vector<1x8x128xf32>
    %c0_18 = arith.constant 0 : index
    %c0_19 = arith.constant 0 : index
    %c0_20 = arith.constant 0 : index
    %60 = vector.load %arg9[%c0_18, %c0_19, %c0_20] : memref<1x8x128xf32, #tpu.memory_space<vmem>>, vector<1x8x128xf32>
    tpu.vector_store %arg9[%c0_18, %c0_19, %c0_20], %59 {strides = array<i32>} : memref<1x8x128xf32, #tpu.memory_space<vmem>>, vector<1x8x128xf32>,
    %61 = tpu.concatenate %3, %5 in 0 : vector<16x96xf32>, vector<16x96xf32> -> vector<32x96xf32>
    %c0_21 = arith.constant 0 : index
    %c0_22 = arith.constant 0 : index
    %62 = vector.load %arg5[%c0_21, %c0_22] : memref<96x48xf32, #tpu.memory_space<vmem>>, vector<96x48xf32>
    %cst_23 = arith.constant dense<0.000000e+00> : vector<32x48xf32>
    %63 = tpu.matmul %61, %62, %cst_23 {dimension_numbers = #tpu.dot_dimension_numbers<[1], [0], [0], [1], [0, 0, 1, 1], [], []>} : vector<32x96xf32>, vector<96x48xf32>, vector<32x48xf32> -> vector<32x48xf32>
    %64 = vector.extract_strided_slice %63 {offsets = [0, 0], sizes = [16, 48], strides = [1, 1]} : vector<32x48xf32> to vector<16x48xf32>
    %65 = vector.extract_strided_slice %63 {offsets = [16, 0], sizes = [16, 48], strides = [1, 1]} : vector<32x48xf32> to vector<16x48xf32>
    %66 = tpu.concatenate %64, %65 in 1 : vector<16x48xf32>, vector<16x48xf32> -> vector<16x96xf32>
    %c0_24 = arith.constant 0 : index
    %c0_25 = arith.constant 0 : index
    %67 = vector.load %arg4[%c0_24, %c0_25] : memref<8x16xf32, #tpu.memory_space<vmem>>, vector<8x16xf32>
    %cst_26 = arith.constant dense<0.000000e+00> : vector<8x96xf32>
    %68 = tpu.matmul %67, %66, %cst_26 {dimension_numbers = #tpu.dot_dimension_numbers<[1], [0], [0], [1], [0, 0, 1, 1], [], []>} : vector<8x16xf32>, vector<16x96xf32>, vector<8x96xf32> -> vector<8x96xf32>
    %69 = vector.extract_strided_slice %68 {offsets = [0, 0], sizes = [8, 48], strides = [1, 1]} : vector<8x96xf32> to vector<8x48xf32>
    %70 = vector.extract_strided_slice %68 {offsets = [0, 48], sizes = [8, 48], strides = [1, 1]} : vector<8x96xf32> to vector<8x48xf32>
    %c0_27 = arith.constant 0 : index
    %c0_28 = arith.constant 0 : index
    %c0_29 = arith.constant 0 : index
    %71 = vector.load %arg12[%c0_27, %c0_28, %c0_29] : memref<1x8x48xf32, #tpu.memory_space<vmem>>, vector<1x8x48xf32>
    %72 = vector.shape_cast %71 : vector<1x8x48xf32> to vector<8x48xf32>
    %73 = vector.shape_cast %69 : vector<8x48xf32> to vector<1x8x48xf32>
    tpu.vector_store %arg12[%c0_27, %c0_28, %c0_29], %73 {strides = array<i32>} : memref<1x8x48xf32, #tpu.memory_space<vmem>>, vector<1x8x48xf32>,
    %c0_30 = arith.constant 0 : index
    %c0_31 = arith.constant 0 : index
    %c0_32 = arith.constant 0 : index
    %74 = vector.load %arg13[%c0_30, %c0_31, %c0_32] : memref<1x8x48xf32, #tpu.memory_space<vmem>>, vector<1x8x48xf32>
    %75 = vector.shape_cast %74 : vector<1x8x48xf32> to vector<8x48xf32>
    %76 = vector.shape_cast %70 : vector<8x48xf32> to vector<1x8x48xf32>
    tpu.vector_store %arg13[%c0_30, %c0_31, %c0_32], %76 {strides = array<i32>} : memref<1x8x48xf32, #tpu.memory_space<vmem>>, vector<1x8x48xf32>,
    %77 = vector.shape_cast %69 : vector<8x48xf32> to vector<1x8x48xf32>
    %cst_33 = arith.constant dense<0xFF800000> : vector<1xf32>
    %78 = vector.multi_reduction <maximumf>, %77, %cst_33 [1, 2] : vector<1x8x48xf32> to vector<1xf32>
    %79 = vector.shape_cast %78 : vector<1xf32> to vector<1x1x1xf32>
    %80 = vector.extract %79[0, 0, 0] : f32 from vector<1x1x1xf32>
    %81 = vector.broadcast %80 : f32 to vector<1x8x128xf32>
    %c0_34 = arith.constant 0 : index
    %c0_35 = arith.constant 0 : index
    %c0_36 = arith.constant 0 : index
    %82 = vector.load %arg10[%c0_34, %c0_35, %c0_36] : memref<1x8x128xf32, #tpu.memory_space<vmem>>, vector<1x8x128xf32>
    tpu.vector_store %arg10[%c0_34, %c0_35, %c0_36], %81 {strides = array<i32>} : memref<1x8x128xf32, #tpu.memory_space<vmem>>, vector<1x8x128xf32>,
    %83 = vector.shape_cast %69 : vector<8x48xf32> to vector<1x8x48xf32>
    %cst_37 = arith.constant dense<0x7F800000> : vector<1xf32>
    %84 = vector.multi_reduction <minimumf>, %83, %cst_37 [1, 2] : vector<1x8x48xf32> to vector<1xf32>
    %85 = vector.shape_cast %84 : vector<1xf32> to vector<1x1x1xf32>
    %86 = vector.extract %85[0, 0, 0] : f32 from vector<1x1x1xf32>
    %87 = vector.broadcast %86 : f32 to vector<1x8x128xf32>
    %c0_38 = arith.constant 0 : index
    %c0_39 = arith.constant 0 : index
    %c0_40 = arith.constant 0 : index
    %88 = vector.load %arg11[%c0_38, %c0_39, %c0_40] : memref<1x8x128xf32, #tpu.memory_space<vmem>>, vector<1x8x128xf32>
    tpu.vector_store %arg11[%c0_38, %c0_39, %c0_40], %87 {strides = array<i32>} : memref<1x8x128xf32, #tpu.memory_space<vmem>>, vector<1x8x128xf32>,
    return
  }
  func.func @transform_0(%arg0: i32) -> i32 {
    %c0_i32 = arith.constant 0 : i32
    %c0_i32_0 = arith.constant 0 : i32
    return %c0_i32 : i32
  }
  func.func @transform_1(%arg0: i32) -> (i32, i32) {
    %c0_i32 = arith.constant 0 : i32
    %c0_i32_0 = arith.constant 0 : i32
    %c0_i32_1 = arith.constant 0 : i32
    return %c0_i32, %c0_i32_0 : i32, i32
  }
  func.func @transform_2(%arg0: i32) -> (i32, i32) {
    %c0_i32 = arith.constant 0 : i32
    %c0_i32_0 = arith.constant 0 : i32
    %c0_i32_1 = arith.constant 0 : i32
    return %c0_i32, %c0_i32_0 : i32, i32
  }
  func.func @transform_3(%arg0: i32) -> (i32, i32) {
    %c0_i32 = arith.constant 0 : i32
    %c0_i32_0 = arith.constant 0 : i32
    %c0_i32_1 = arith.constant 0 : i32
    return %c0_i32, %c0_i32_0 : i32, i32
  }
  func.func @transform_4(%arg0: i32) -> (i32, i32) {
    %c0_i32 = arith.constant 0 : i32
    %c0_i32_0 = arith.constant 0 : i32
    %c0_i32_1 = arith.constant 0 : i32
    return %c0_i32, %c0_i32_0 : i32, i32
  }
  func.func @transform_5(%arg0: i32) -> (i32, i32, i32) {
    %c0_i32 = arith.constant 0 : i32
    %c0_i32_0 = arith.constant 0 : i32
    %c0_i32_1 = arith.constant 0 : i32
    return %arg0, %c0_i32, %c0_i32_0 : i32, i32, i32
  }
  func.func @transform_6(%arg0: i32) -> (i32, i32, i32) {
    %c0_i32 = arith.constant 0 : i32
    %c0_i32_0 = arith.constant 0 : i32
    %c0_i32_1 = arith.constant 0 : i32
    return %arg0, %c0_i32, %c0_i32_0 : i32, i32, i32
  }
  func.func @transform_7(%arg0: i32) -> (i32, i32, i32) {
    %c0_i32 = arith.constant 0 : i32
    %c0_i32_0 = arith.constant 0 : i32
    %c0_i32_1 = arith.constant 0 : i32
    return %arg0, %c0_i32, %c0_i32_0 : i32, i32, i32
  }
  func.func @transform_8(%arg0: i32) -> (i32, i32, i32) {
    %c0_i32 = arith.constant 0 : i32
    %c0_i32_0 = arith.constant 0 : i32
    %c0_i32_1 = arith.constant 0 : i32
    return %arg0, %c0_i32, %c0_i32_0 : i32, i32, i32
  }
  func.func @transform_9(%arg0: i32) -> (i32, i32, i32) {
    %c0_i32 = arith.constant 0 : i32
    %c0_i32_0 = arith.constant 0 : i32
    %c0_i32_1 = arith.constant 0 : i32
    return %arg0, %c0_i32, %c0_i32_0 : i32, i32, i32
  }
  func.func @transform_10(%arg0: i32) -> (i32, i32, i32) {
    %c0_i32 = arith.constant 0 : i32
    %c0_i32_0 = arith.constant 0 : i32
    %c0_i32_1 = arith.constant 0 : i32
    return %arg0, %c0_i32, %c0_i32_0 : i32, i32, i32
  }
  func.func @transform_11(%arg0: i32) -> (i32, i32, i32) {
    %c0_i32 = arith.constant 0 : i32
    %c0_i32_0 = arith.constant 0 : i32
    %c0_i32_1 = arith.constant 0 : i32
    return %arg0, %c0_i32, %c0_i32_0 : i32, i32, i32
  }
  func.func @transform_12(%arg0: i32) -> (i32, i32, i32) {
    %c0_i32 = arith.constant 0 : i32
    %c0_i32_0 = arith.constant 0 : i32
    %c0_i32_1 = arith.constant 0 : i32
    return %arg0, %c0_i32, %c0_i32_0 : i32, i32, i32
  }
}

</mosaic_0001>

<llo_original>
// kernel: msssim.3
$region0: #{msssim.3}
  #allocation0 [shape = 'u32[]', space=smem, size = 0x4, offset = 0x4, fixed_abs, tag = 'smem constant byte address 0x4 - core index']
  #allocation1 [shape = 'u32[72,128]{1,0:T(1,128)}', space=vmem, size = 0x9000, scoped, tag = 'internal scratch']
  %s0 = inlined_call_operand.vmem [shape: f32[2], index: 0, kind: input, shape index: {}]
  %s1 = inlined_call_operand.vmem [shape: f32[6,16], index: 1, kind: input, shape index: {}]
  %s2 = inlined_call_operand.vmem [shape: f32[96,36], index: 2, kind: input, shape index: {}]
  %s3 = inlined_call_operand.vmem [shape: f32[8,16], index: 3, kind: input, shape index: {}]
  %s4 = inlined_call_operand.vmem [shape: f32[96,48], index: 4, kind: input, shape index: {}]
  %s5 = inlined_call_operand.vmem [shape: f32[1,16,96], index: 5, kind: input, shape index: {}]
  %s6 = inlined_call_operand.vmem [shape: f32[1,16,96], index: 6, kind: input, shape index: {}]
  %s7 = inlined_call_operand.vmem [shape: f32[1,8,128], index: 7, kind: output, shape index: {0}]
  %s8 = inlined_call_operand.vmem [shape: f32[1,8,128], index: 8, kind: output, shape index: {1}]
  %s9 = inlined_call_operand.vmem [shape: f32[1,8,128], index: 9, kind: output, shape index: {2}]
  %s10 = inlined_call_operand.vmem [shape: f32[1,8,128], index: 10, kind: output, shape index: {3}]
  %s11 = inlined_call_operand.vmem [shape: f32[1,8,48], index: 11, kind: output, shape index: {4}]
  %s12 = inlined_call_operand.vmem [shape: f32[1,8,48], index: 12, kind: output, shape index: {5}]
  %13 = xla_tuple %s7, %s8, %s9, %s10, %s11, %s12
  %s14 = sld [smem:[#allocation0]]
  $region82: #{msssim.3} parent=0
    _
  %s16 = ssub.s32 1, %s14
  %s17 = scalar_select 0, %s16, %s14
  $region1: #{msssim.3} parent=0
    #allocation2 [shape = 'u8[512]{0}', space=smem, size = 0x200, scoped, tag = 'input window, operand 0, single buffered']
    #allocation3 [shape = 's32[1]{0}', space=sflag, size = 0x4, scoped, tag = 'scoped memory for msssim.3']
    %18 = vsyncpa [#allocation3], 0
    // Predicated region
    $region2: #{msssim.3} parent=1 // pred_check
      _
    $region3: #{msssim.3} parent=1 // pred_check_branch
      %20 = sbr.rel (0) target = $region5
    $region4: #{msssim.3} parent=1 // pred_region
      %22 = vsyncadd [#allocation3], 0
      %s24 = sshll.u32 %s0, 4
      %s25 = int_to_ptr.vmem [resolvable:$true] %s24
      %27 = dma.vmem_to_smem %s25, 16, [#allocation2], [#allocation3]
    $region5: #{msssim.3} parent=1 // pred_fallthru
      _
    // Predicated region
    $region6: #{msssim.3} parent=1 // pred_check
      _
    $region7: #{msssim.3} parent=1 // pred_check_branch
      %29 = sbr.rel (0) target = $region9
    $region8: #{msssim.3} parent=1 // pred_region
      _
    $region9: #{msssim.3} parent=1 // pred_fallthru
      _
    // Predicated region
    $region10: #{msssim.3} parent=1 // pred_check
      _
    $region11: #{msssim.3} parent=1 // pred_check_branch
      %31 = sbr.rel (0) target = $region13
    $region12: #{msssim.3} parent=1 // pred_region
      _
    $region13: #{msssim.3} parent=1 // pred_fallthru
      _
    // Predicated region
    $region14: #{msssim.3} parent=1 // pred_check
      _
    $region15: #{msssim.3} parent=1 // pred_check_branch
      %33 = sbr.rel (0) target = $region17
    $region16: #{msssim.3} parent=1 // pred_region
      _
    $region17: #{msssim.3} parent=1 // pred_fallthru
      _
    // Predicated region
    $region18: #{msssim.3} parent=1 // pred_check
      _
    $region19: #{msssim.3} parent=1 // pred_check_branch
      %35 = sbr.rel (0) target = $region21
    $region20: #{msssim.3} parent=1 // pred_region
      _
    $region21: #{msssim.3} parent=1 // pred_fallthru
      _
    // Predicated region
    $region22: #{msssim.3} parent=1 // pred_check
      _
    $region23: #{msssim.3} parent=1 // pred_check_branch
      %37 = sbr.rel (0) target = $region25
    $region24: #{msssim.3} parent=1 // pred_region
      _
    $region25: #{msssim.3} parent=1 // pred_fallthru
      _
    // Predicated region
    $region26: #{msssim.3} parent=1 // pred_check
      _
    $region27: #{msssim.3} parent=1 // pred_check_branch
      %39 = sbr.rel (0) target = $region29
    $region28: #{msssim.3} parent=1 // pred_region
      _
    $region29: #{msssim.3} parent=1 // pred_fallthru
      _
    // Predicated region
    $region30: #{msssim.3} parent=1 // pred_check
      _
    $region31: #{msssim.3} parent=1 // pred_check_branch
      %41 = sbr.rel (0) target = $region33
    $region32: #{msssim.3} parent=1 // pred_region
      %43 = dma.done [#allocation3], 16
    $region33: #{msssim.3} parent=1 // pred_fallthru
      _
    %44 = sfence
    %s45 = sld [smem:[#allocation2]]
    %s46 = sld [smem:[#allocation2 + $0x1]]
    %v47 = vld [vmem:[%s5] sm:$0xff]
    %v48 = vld [vmem:[%s5 + $0x8] sm:$0xff]
    %v49 = vld [vmem:[%s6] sm:$0xff]
    %v50 = vld [vmem:[%s6 + $0x8] sm:$0xff]
    %v51 = vmul.f32 %v47, %v47
    %v52 = vmul.f32 %v48, %v48
    %v53 = vmul.f32 %v49, %v49
    %v54 = vmul.f32 %v50, %v50
    %v55 = vmul.f32 %v47, %v49
    %v56 = vmul.f32 %v48, %v50
    %v57 = vld [vmem:[%s2] sm:$0xff]
    %v58 = vld [vmem:[%s2 + $0x8] sm:$0xff]
    %v59 = vld [vmem:[%s2 + $0x10] sm:$0xff]
    %v60 = vld [vmem:[%s2 + $0x18] sm:$0xff]
    %v61 = vld [vmem:[%s2 + $0x20] sm:$0xff]
    %v62 = vld [vmem:[%s2 + $0x28] sm:$0xff]
    %v63 = vld [vmem:[%s2 + $0x30] sm:$0xff]
    %v64 = vld [vmem:[%s2 + $0x38] sm:$0xff]
    %v65 = vld [vmem:[%s2 + $0x40] sm:$0xff]
    %v66 = vld [vmem:[%s2 + $0x48] sm:$0xff]
    %v67 = vld [vmem:[%s2 + $0x50] sm:$0xff]
    %v68 = vld [vmem:[%s2 + $0x58] sm:$0xff]
    %vm69 = vcmask 785408
    %v71 = vsel %vm69, %v47, 0
    %v74 = vsel %vm69, %v48, 0
    %v77 = vsel %vm69, %v49, 0
    %v80 = vsel %vm69, %v50, 0
    %v83 = vsel %vm69, %v51, 0
    %v86 = vsel %vm69, %v52, 0
    %v89 = vsel %vm69, %v53, 0
    %v92 = vsel %vm69, %v54, 0
    %v95 = vsel %vm69, %v55, 0
    %v98 = vsel %vm69, %v56, 0
    %100 = vmatpush.msra.mxu0 0.0
    %101 = vmatpush.msra.mxu0 0.0
    %102 = vmatpush.msra.mxu0 0.0
    %103 = vmatpush.msra.mxu0 0.0
    %104 = vmatpush.msra.mxu0 %v68
    %105 = vmatpush.msra.mxu0 %v67
    %106 = vmatpush.msra.mxu0 %v66
    %107 = vmatpush.msra.mxu0 %v65
    %108 = vmatpush.msra.mxu0 %v64
    %109 = vmatpush.msra.mxu0 %v63
    %110 = vmatpush.msra.mxu0 %v62
    %111 = vmatpush.msra.mxu0 %v61
    %112 = vmatpush.msra.mxu0 %v60
    %113 = vmatpush.msra.mxu0 %v59
    %114 = vmatpush.msra.mxu0 %v58
    %115 = vmatpush.msra.mxu0 %v57
    %116 = vmatmul.f32.gmra.mxu0 %v71
    %v117 = vpop.f32.mrf.mxu0
    %v118 = vadd.f32 0.0, %v117
    %119 = vmatmul.f32.gmra.mxu0 %v74
    %v120 = vpop.f32.mrf.mxu0
    %v121 = vadd.f32 0.0, %v120
    %122 = vmatmul.f32.gmra.mxu0 %v77
    %v123 = vpop.f32.mrf.mxu0
    %v124 = vadd.f32 0.0, %v123
    %125 = vmatmul.f32.gmra.mxu0 %v80
    %v126 = vpop.f32.mrf.mxu0
    %v127 = vadd.f32 0.0, %v126
    %128 = vmatmul.f32.gmra.mxu0 %v83
    %v129 = vpop.f32.mrf.mxu0
    %v130 = vadd.f32 0.0, %v129
    %131 = vmatmul.f32.gmra.mxu0 %v86
    %v132 = vpop.f32.mrf.mxu0
    %v133 = vadd.f32 0.0, %v132
    %134 = vmatmul.f32.gmra.mxu0 %v89
    %v135 = vpop.f32.mrf.mxu0
    %v136 = vadd.f32 0.0, %v135
    %137 = vmatmul.f32.gmra.mxu0 %v92
    %v138 = vpop.f32.mrf.mxu0
    %v139 = vadd.f32 0.0, %v138
    %140 = vmatmul.f32.gmra.mxu0 %v95
    %v141 = vpop.f32.mrf.mxu0
    %v142 = vadd.f32 0.0, %v141
    %143 = vmatmul.f32.gmra.mxu0 %v98
    %v144 = vpop.f32.mrf.mxu0
    %v145 = vadd.f32 0.0, %v144
    %146 = vdwg.mxu0
    %149 = vrot.lane.b32.xlu0 %v124, 36
    %v150 = vpop.permute.xlu0 %149
    %151 = vrot.lane.b32.xlu0 %v127, 36
    %v152 = vpop.permute.xlu0 %151
    %157 = vrot.lane.b32.xlu0 %v130, 72
    %v158 = vpop.permute.xlu0 %157
    %159 = vrot.lane.b32.xlu0 %v133, 72
    %v160 = vpop.permute.xlu0 %159
    %165 = vrot.lane.b32.xlu0 %v136, 108
    %v166 = vpop.permute.xlu0 %165
    %167 = vrot.lane.b32.xlu0 %v139, 108
    %v168 = vpop.permute.xlu0 %167
    %173 = vrot.lane.b32.xlu0 %v142, 16
    %v174 = vpop.permute.xlu0 %173
    %175 = vrot.lane.b32.xlu0 %v145, 16
    %v176 = vpop.permute.xlu0 %175
    %vm179 = vcmask 293888
    %v180 = vsel %vm179, %v118, %v150
    %v181 = vsel %vm179, %v121, %v152
    %vm182 = vcmask 588800
    %v183 = vsel %vm182, %v180, %v158
    %v184 = vsel %vm182, %v181, %v160
    %vm185 = vcmask 883712
    %v186 = vsel %vm185, %v183, %v166
    %v187 = vsel %vm185, %v184, %v168
    %vm188 = vcmask 130048
    %v189 = vsel %vm188, %v166, %v174
    %v190 = vsel %vm188, %v168, %v176
    %v191 = vld [vmem:[%s1] sm:$0x3f]
    %v193 = vsel %vm188, %v191, 0
    %195 = vmatpush.msra.mxu0 0.0
    %196 = vmatpush.msra.mxu0 0.0
    %197 = vmatpush.msra.mxu0 0.0
    %198 = vmatpush.msra.mxu0 0.0
    %199 = vmatpush.msra.mxu0 0.0
    %200 = vmatpush.msra.mxu0 0.0
    %201 = vmatpush.msra.mxu0 0.0
    %202 = vmatpush.msra.mxu0 0.0
    %203 = vmatpush.msra.mxu0 0.0
    %204 = vmatpush.msra.mxu0 0.0
    %205 = vmatpush.msra.mxu0 0.0
    %206 = vmatpush.msra.mxu0 0.0
    %207 = vmatpush.msra.mxu0 0.0
    %208 = vmatpush.msra.mxu0 0.0
    %209 = vmatpush.msra.mxu0 %v187
    %210 = vmatpush.msra.mxu0 %v186
    %211 = vmatmul.f32.gmra.mxu0 %v193
    %v212 = vpop.f32.mrf.mxu0
    %v213 = vadd.f32 0.0, %v212
    %214 = vdwg.mxu0
    %215 = vmatpush.msra.mxu0 0.0
    %216 = vmatpush.msra.mxu0 0.0
    %217 = vmatpush.msra.mxu0 0.0
    %218 = vmatpush.msra.mxu0 0.0
    %219 = vmatpush.msra.mxu0 0.0
    %220 = vmatpush.msra.mxu0 0.0
    %221 = vmatpush.msra.mxu0 0.0
    %222 = vmatpush.msra.mxu0 0.0
    %223 = vmatpush.msra.mxu0 0.0
    %224 = vmatpush.msra.mxu0 0.0
    %225 = vmatpush.msra.mxu0 0.0
    %226 = vmatpush.msra.mxu0 0.0
    %227 = vmatpush.msra.mxu0 0.0
    %228 = vmatpush.msra.mxu0 0.0
    %229 = vmatpush.msra.mxu0 %v190
    %230 = vmatpush.msra.mxu0 %v189
    %231 = vmatmul.f32.gmra.mxu0 %v193
    %v232 = vpop.f32.mrf.mxu0
    %v233 = vadd.f32 0.0, %v232
    %234 = vdwg.mxu0
    %v235 = vmul.f32 %v213, %v213
    %237 = vrot.lane.b32.xlu0 %v213, 92
    %v238 = vpop.permute.xlu0 %237
    %v240 = vmul.f32 %v213, %v238
    %242 = vrot.lane.b32.xlu0 %v235, 72
    %v243 = vpop.permute.xlu0 %242
    %v245 = vsub.f32 %v213, %v243
    %v246 = vsub.f32 %v233, %v243
    %248 = vrot.lane.b32.xlu0 %v240, 16
    %v249 = vpop.permute.xlu0 %248
    %v251 = vsub.f32 %v233, %v249
    %v252 = vmul.f32 %v251, 2.0
    %v253 = vstv %s46
    %v254 = vadd.f32 %v252, %v253
    %257 = vrot.lane.b32.xlu0 %v245, 92
    %v258 = vpop.permute.xlu0 %257
    %259 = vrot.lane.b32.xlu0 %v246, 92
    %v260 = vpop.permute.xlu0 %259
    %vm261 = vcmask 752640
    %v262 = vsel %vm261, %v258, %v260
    %v264 = vadd.f32 %v245, %v262
    %v265 = vadd.f32 %v264, %v253
    %267 = vrot.lane.b32.xlu0 %v265, 72
    %v268 = vpop.permute.xlu0 %267
    %v270 = vrcp.pop %v268
    %v271 = vmul.f32 %v268, %v270
    %v272 = vsub.f32 1.0, %v271
    %v273 = vmul.f32 %v270, %v272
    %v274 = vadd.f32 %v270, %v273
    %vm275 = vweird.f32 %v268
    %vm276 = vweird.f32 %v270
    %vm277 = vmor %vm275, %vm276
    %v278 = vsel %vm277, %v270, %v274
    %v279 = vand.u32 2147483647, %v268
    %vm280 = vcmp.eq.f32.partialorder %v279, 8.507059e+37
    %v281 = vand.u32 %v268, 2147483648
    %v282 = vor.u32 1.1754944e-38, %v281
    %v283 = vsel %vm280, %v282, %v278
    %v284 = vmul.f32 %v254, %v283
    %v285 = vmul.f32 %v240, 2.0
    %v286 = vstv %s45
    %v287 = vadd.f32 %v285, %v286
    %289 = vrot.lane.b32.xlu0 %v254, 112
    %v290 = vpop.permute.xlu0 %289
    %v292 = vmul.f32 %v287, %v290
    %293 = vrot.lane.b32.xlu0 %v235, 92
    %v294 = vpop.permute.xlu0 %293
    %v296 = vadd.f32 %v235, %v294
    %v297 = vadd.f32 %v296, %v286
    %298 = vrot.lane.b32.xlu0 %v265, 56
    %v299 = vpop.permute.xlu0 %298
    %v301 = vmul.f32 %v297, %v299
    %v302 = vrcp.pop %v301
    %v303 = vmul.f32 %v301, %v302
    %v304 = vsub.f32 1.0, %v303
    %v305 = vmul.f32 %v302, %v304
    %v306 = vadd.f32 %v302, %v305
    %vm307 = vweird.f32 %v301
    %vm308 = vweird.f32 %v302
    %vm309 = vmor %vm307, %vm308
    %v310 = vsel %vm309, %v302, %v306
    %v311 = vand.u32 2147483647, %v301
    %vm312 = vcmp.eq.f32.partialorder %v311, 8.507059e+37
    %v313 = vand.u32 %v301, 2147483648
    %v314 = vor.u32 1.1754944e-38, %v313
    %v315 = vsel %vm312, %v314, %v310
    %v316 = vmul.f32 %v292, %v315
    %vm317 = vcmask 291840
    %v318 = vsel %vm317, %v316, 0.0
    %319 = vadd.xlane.f32.xlu0 %v318
    %v320 = vpop.xlane.xlu0 %319
    %v321 = vrot.slane %v320, 4
    %v322 = vadd.f32 %v320, %v321
    %v323 = vrot.slane %v322, 2
    %v324 = vadd.f32 %v322, %v323
    %v325 = vrot.slane %v324, 1
    %v326 = vadd.f32 %v324, %v325
    %s327 = vtos %v326
    %v328 = vstv %s327
    %329 = vst [vmem:[%s7] sm:$0xff] %v328
    %331 = vrot.lane.b32.xlu0 %v284, 112
    %v332 = vpop.permute.xlu0 %331
    %v334 = vsel %vm317, %v332, 0.0
    %335 = vadd.xlane.f32.xlu0 %v334
    %v336 = vpop.xlane.xlu0 %335
    %v337 = vrot.slane %v336, 4
    %v338 = vadd.f32 %v336, %v337
    %v339 = vrot.slane %v338, 2
    %v340 = vadd.f32 %v338, %v339
    %v341 = vrot.slane %v340, 1
    %v342 = vadd.f32 %v340, %v341
    %s343 = vtos %v342
    %v344 = vstv %s343
    %345 = vst [vmem:[%s8] sm:$0xff] %v344
    %v346 = vld [vmem:[%s4] sm:$0xff]
    %v347 = vld [vmem:[%s4 + $0x8] sm:$0xff]
    %v348 = vld [vmem:[%s4 + $0x10] sm:$0xff]
    %v349 = vld [vmem:[%s4 + $0x18] sm:$0xff]
    %v350 = vld [vmem:[%s4 + $0x20] sm:$0xff]
    %v351 = vld [vmem:[%s4 + $0x28] sm:$0xff]
    %v352 = vld [vmem:[%s4 + $0x30] sm:$0xff]
    %v353 = vld [vmem:[%s4 + $0x38] sm:$0xff]
    %v354 = vld [vmem:[%s4 + $0x40] sm:$0xff]
    %v355 = vld [vmem:[%s4 + $0x48] sm:$0xff]
    %v356 = vld [vmem:[%s4 + $0x50] sm:$0xff]
    %v357 = vld [vmem:[%s4 + $0x58] sm:$0xff]
    %358 = vmatpush.msra.mxu0 0.0
    %359 = vmatpush.msra.mxu0 0.0
    %360 = vmatpush.msra.mxu0 0.0
    %361 = vmatpush.msra.mxu0 0.0
    %362 = vmatpush.msra.mxu0 %v357
    %363 = vmatpush.msra.mxu0 %v356
    %364 = vmatpush.msra.mxu0 %v355
    %365 = vmatpush.msra.mxu0 %v354
    %366 = vmatpush.msra.mxu0 %v353
    %367 = vmatpush.msra.mxu0 %v352
    %368 = vmatpush.msra.mxu0 %v351
    %369 = vmatpush.msra.mxu0 %v350
    %370 = vmatpush.msra.mxu0 %v349
    %371 = vmatpush.msra.mxu0 %v348
    %372 = vmatpush.msra.mxu0 %v347
    %373 = vmatpush.msra.mxu0 %v346
    %374 = vmatmul.f32.gmra.mxu0 %v71
    %v375 = vpop.f32.mrf.mxu0
    %v376 = vadd.f32 0.0, %v375
    %377 = vmatmul.f32.gmra.mxu0 %v74
    %v378 = vpop.f32.mrf.mxu0
    %v379 = vadd.f32 0.0, %v378
    %380 = vmatmul.f32.gmra.mxu0 %v77
    %v381 = vpop.f32.mrf.mxu0
    %v382 = vadd.f32 0.0, %v381
    %383 = vmatmul.f32.gmra.mxu0 %v80
    %v384 = vpop.f32.mrf.mxu0
    %v385 = vadd.f32 0.0, %v384
    %386 = vdwg.mxu0
    %389 = vrot.lane.b32.xlu0 %v382, 48
    %v390 = vpop.permute.xlu0 %389
    %391 = vrot.lane.b32.xlu0 %v385, 48
    %v392 = vpop.permute.xlu0 %391
    %vm395 = vcmask 392192
    %v396 = vsel %vm395, %v376, %v390
    %v397 = vsel %vm395, %v379, %v392
    %v398 = vld [vmem:[%s3] sm:$0xff]
    %v400 = vsel %vm188, %v398, 0
    %402 = vmatpush.msra.mxu0 0.0
    %403 = vmatpush.msra.mxu0 0.0
    %404 = vmatpush.msra.mxu0 0.0
    %405 = vmatpush.msra.mxu0 0.0
    %406 = vmatpush.msra.mxu0 0.0
    %407 = vmatpush.msra.mxu0 0.0
    %408 = vmatpush.msra.mxu0 0.0
    %409 = vmatpush.msra.mxu0 0.0
    %410 = vmatpush.msra.mxu0 0.0
    %411 = vmatpush.msra.mxu0 0.0
    %412 = vmatpush.msra.mxu0 0.0
    %413 = vmatpush.msra.mxu0 0.0
    %414 = vmatpush.msra.mxu0 0.0
    %415 = vmatpush.msra.mxu0 0.0
    %416 = vmatpush.msra.mxu0 %v397
    %417 = vmatpush.msra.mxu0 %v396
    %418 = vmatmul.f32.gmra.mxu0 %v400
    %v419 = vpop.f32.mrf.mxu0
    %v420 = vadd.f32 0.0, %v419
    %421 = vdwg.mxu0
    %422 = vst.msk [vmem:[%s11] sm:$0xff] %vm395, %v420
    %424 = vrot.lane.b32.xlu0 %v420, 80
    %v425 = vpop.permute.xlu0 %424
    %427 = vst.msk [vmem:[%s12] sm:$0xff] %vm395, %v425
    %v428 = vsel %vm395, %v420, -inf
    %429 = vmax.xlane.f32.xlu0 %v428
    %v430 = vpop.xlane.xlu0 %429
    %v431 = vrot.slane %v430, 4
    %v432 = vmax.f32 %v430, %v431
    %v433 = vrot.slane %v432, 2
    %v434 = vmax.f32 %v432, %v433
    %v435 = vrot.slane %v434, 1
    %v436 = vmax.f32 %v434, %v435
    %s437 = vtos %v436
    %v438 = vstv %s437
    %439 = vst [vmem:[%s9] sm:$0xff] %v438
    %v440 = vsel %vm395, %v420, inf
    %441 = vmin.xlane.f32.xlu0 %v440
    %v442 = vpop.xlane.xlu0 %441
    %v443 = vrot.slane %v442, 4
    %v444 = vmin.f32 %v442, %v443
    %v445 = vrot.slane %v444, 2
    %v446 = vmin.f32 %v444, %v445
    %v447 = vrot.slane %v446, 1
    %v448 = vmin.f32 %v446, %v447
    %s449 = vtos %v448
    %v450 = vstv %s449
    %451 = vst [vmem:[%s10] sm:$0xff] %v450
    // Predicated region
    $region34: #{msssim.3} parent=1 // pred_check
      _
    $region35: #{msssim.3} parent=1 // pred_check_branch
      %453 = sbr.rel (0) target = $region37
    $region36: #{msssim.3} parent=1 // pred_region
      _
    $region37: #{msssim.3} parent=1 // pred_fallthru
      _
    // Predicated region
    $region38: #{msssim.3} parent=1 // pred_check
      _
    $region39: #{msssim.3} parent=1 // pred_check_branch
      %455 = sbr.rel (0) target = $region41
    $region40: #{msssim.3} parent=1 // pred_region
      _
    $region41: #{msssim.3} parent=1 // pred_fallthru
      _
    // Predicated region
    $region42: #{msssim.3} parent=1 // pred_check
      _
    $region43: #{msssim.3} parent=1 // pred_check_branch
      %457 = sbr.rel (0) target = $region45
    $region44: #{msssim.3} parent=1 // pred_region
      _
    $region45: #{msssim.3} parent=1 // pred_fallthru
      _
    // Predicated region
    $region46: #{msssim.3} parent=1 // pred_check
      _
    $region47: #{msssim.3} parent=1 // pred_check_branch
      %459 = sbr.rel (0) target = $region49
    $region48: #{msssim.3} parent=1 // pred_region
      _
    $region49: #{msssim.3} parent=1 // pred_fallthru
      _
    // Predicated region
    $region50: #{msssim.3} parent=1 // pred_check
      _
    $region51: #{msssim.3} parent=1 // pred_check_branch
      %461 = sbr.rel (0) target = $region53
    $region52: #{msssim.3} parent=1 // pred_region
      _
    $region53: #{msssim.3} parent=1 // pred_fallthru
      _
    // Predicated region
    $region54: #{msssim.3} parent=1 // pred_check
      _
    $region55: #{msssim.3} parent=1 // pred_check_branch
      %463 = sbr.rel (0) target = $region57
    $region56: #{msssim.3} parent=1 // pred_region
      _
    $region57: #{msssim.3} parent=1 // pred_fallthru
      _
    // Predicated region
    $region58: #{msssim.3} parent=1 // pred_check
      _
    $region59: #{msssim.3} parent=1 // pred_check_branch
      %465 = sbr.rel (0) target = $region61
    $region60: #{msssim.3} parent=1 // pred_region
      _
    $region61: #{msssim.3} parent=1 // pred_fallthru
      _
    // Predicated region
    $region62: #{msssim.3} parent=1 // pred_check
      _
    $region63: #{msssim.3} parent=1 // pred_check_branch
      %467 = sbr.rel (0) target = $region65
    $region64: #{msssim.3} parent=1 // pred_region
      _
    $region65: #{msssim.3} parent=1 // pred_fallthru
      _
    // Predicated region
    $region66: #{msssim.3} parent=1 // pred_check
      _
    $region67: #{msssim.3} parent=1 // pred_check_branch
      %469 = sbr.rel (0) target = $region69
    $region68: #{msssim.3} parent=1 // pred_region
      _
    $region69: #{msssim.3} parent=1 // pred_fallthru
      _
    // Predicated region
    $region70: #{msssim.3} parent=1 // pred_check
      _
    $region71: #{msssim.3} parent=1 // pred_check_branch
      %471 = sbr.rel (0) target = $region73
    $region72: #{msssim.3} parent=1 // pred_region
      _
    $region73: #{msssim.3} parent=1 // pred_fallthru
      _
    // Predicated region
    $region74: #{msssim.3} parent=1 // pred_check
      _
    $region75: #{msssim.3} parent=1 // pred_check_branch
      %473 = sbr.rel (0) target = $region77
    $region76: #{msssim.3} parent=1 // pred_region
      _
    $region77: #{msssim.3} parent=1 // pred_fallthru
      _
    // Predicated region
    $region78: #{msssim.3} parent=1 // pred_check
      _
    $region79: #{msssim.3} parent=1 // pred_check_branch
      %475 = sbr.rel (0) target = $region81
    $region80: #{msssim.3} parent=1 // pred_region
      _
    $region81: #{msssim.3} parent=1 // pred_fallthru
      _
    %476 = vsyncpa [#allocation3], 1

// kernel: msssim.2
$region0: #{msssim.2}
  #allocation0 [shape = 'u32[]', space=smem, size = 0x4, offset = 0x4, fixed_abs, tag = 'smem constant byte address 0x4 - core index']
  #allocation1 [shape = 'u32[72,128]{1,0:T(1,128)}', space=vmem, size = 0x9000, scoped, tag = 'internal scratch']
  %s0 = inlined_call_operand.vmem [shape: f32[2], index: 0, kind: input, shape index: {}]
  %s1 = inlined_call_operand.vmem [shape: f32[22,32], index: 1, kind: input, shape index: {}]
  %s2 = inlined_call_operand.vmem [shape: f32[192,132], index: 2, kind: input, shape index: {}]
  %s3 = inlined_call_operand.vmem [shape: f32[16,32], index: 3, kind: input, shape index: {}]
  %s4 = inlined_call_operand.vmem [shape: f32[192,96], index: 4, kind: input, shape index: {}]
  %s5 = inlined_call_operand.vmem [shape: f32[1,32,192], index: 5, kind: input, shape index: {}]
  %s6 = inlined_call_operand.vmem [shape: f32[1,32,192], index: 6, kind: input, shape index: {}]
  %s7 = inlined_call_operand.vmem [shape: f32[1,8,128], index: 7, kind: output, shape index: {0}]
  %s8 = inlined_call_operand.vmem [shape: f32[1,8,128], index: 8, kind: output, shape index: {1}]
  %s9 = inlined_call_operand.vmem [shape: f32[1,8,128], index: 9, kind: output, shape index: {2}]
  %s10 = inlined_call_operand.vmem [shape: f32[1,8,128], index: 10, kind: output, shape index: {3}]
  %s11 = inlined_call_operand.vmem [shape: f32[1,16,96], index: 11, kind: output, shape index: {4}]
  %s12 = inlined_call_operand.vmem [shape: f32[1,16,96], index: 12, kind: output, shape index: {5}]
  %13 = xla_tuple %s7, %s8, %s9, %s10, %s11, %s12
  %s14 = sld [smem:[#allocation0]]
  $region82: #{msssim.2} parent=0
    _
  %s16 = ssub.s32 1, %s14
  %s17 = scalar_select 0, %s16, %s14
  $region1: #{msssim.2} parent=0
    #allocation2 [shape = 'u8[512]{0}', space=smem, size = 0x200, scoped, tag = 'input window, operand 0, single buffered']
    #allocation3 [shape = 's32[1]{0}', space=sflag, size = 0x4, scoped, tag = 'scoped memory for msssim.2']
    %18 = vsyncpa [#allocation3], 0
    // Predicated region
    $region2: #{msssim.2} parent=1 // pred_check
      _
    $region3: #{msssim.2} parent=1 // pred_check_branch
      %20 = sbr.rel (0) target = $region5
    $region4: #{msssim.2} parent=1 // pred_region
      %22 = vsyncadd [#allocation3], 0
      %s24 = sshll.u32 %s0, 4
      %s25 = int_to_ptr.vmem [resolvable:$true] %s24
      %27 = dma.vmem_to_smem %s25, 16, [#allocation2], [#allocation3]
    $region5: #{msssim.2} parent=1 // pred_fallthru
      _
    // Predicated region
    $region6: #{msssim.2} parent=1 // pred_check
      _
    $region7: #{msssim.2} parent=1 // pred_check_branch
      %29 = sbr.rel (0) target = $region9
    $region8: #{msssim.2} parent=1 // pred_region
      _
    $region9: #{msssim.2} parent=1 // pred_fallthru
      _
    // Predicated region
    $region10: #{msssim.2} parent=1 // pred_check
      _
    $region11: #{msssim.2} parent=1 // pred_check_branch
      %31 = sbr.rel (0) target = $region13
    $region12: #{msssim.2} parent=1 // pred_region
      _
    $region13: #{msssim.2} parent=1 // pred_fallthru
      _
    // Predicated region
    $region14: #{msssim.2} parent=1 // pred_check
      _
    $region15: #{msssim.2} parent=1 // pred_check_branch
      %33 = sbr.rel (0) target = $region17
    $region16: #{msssim.2} parent=1 // pred_region
      _
    $region17: #{msssim.2} parent=1 // pred_fallthru
      _
    // Predicated region
    $region18: #{msssim.2} parent=1 // pred_check
      _
    $region19: #{msssim.2} parent=1 // pred_check_branch
      %35 = sbr.rel (0) target = $region21
    $region20: #{msssim.2} parent=1 // pred_region
      _
    $region21: #{msssim.2} parent=1 // pred_fallthru
      _
    // Predicated region
    $region22: #{msssim.2} parent=1 // pred_check
      _
    $region23: #{msssim.2} parent=1 // pred_check_branch
      %37 = sbr.rel (0) target = $region25
    $region24: #{msssim.2} parent=1 // pred_region
      _
    $region25: #{msssim.2} parent=1 // pred_fallthru
      _
    // Predicated region
    $region26: #{msssim.2} parent=1 // pred_check
      _
    $region27: #{msssim.2} parent=1 // pred_check_branch
      %39 = sbr.rel (0) target = $region29
    $region28: #{msssim.2} parent=1 // pred_region
      _
    $region29: #{msssim.2} parent=1 // pred_fallthru
      _
    // Predicated region
    $region30: #{msssim.2} parent=1 // pred_check
      _
    $region31: #{msssim.2} parent=1 // pred_check_branch
      %41 = sbr.rel (0) target = $region33
    $region32: #{msssim.2} parent=1 // pred_region
      %43 = dma.done [#allocation3], 16
    $region33: #{msssim.2} parent=1 // pred_fallthru
      _
    %44 = sfence
    %s45 = sld [smem:[#allocation2]]
    %s46 = sld [smem:[#allocation2 + $0x1]]
    %v47 = vld [vmem:[%s5] sm:$0xff]
    %v48 = vld [vmem:[%s5 + $0x8] sm:$0xff]
    %v49 = vld [vmem:[%s5 + $0x10] sm:$0xff]
    %v50 = vld [vmem:[%s5 + $0x18] sm:$0xff]
    %v51 = vld [vmem:[%s5 + $0x20] sm:$0xff]
    %v52 = vld [vmem:[%s5 + $0x28] sm:$0xff]
    %v53 = vld [vmem:[%s5 + $0x30] sm:$0xff]
    %v54 = vld [vmem:[%s5 + $0x38] sm:$0xff]
    %v55 = vld [vmem:[%s6] sm:$0xff]
    %v56 = vld [vmem:[%s6 + $0x8] sm:$0xff]
    %v57 = vld [vmem:[%s6 + $0x10] sm:$0xff]
    %v58 = vld [vmem:[%s6 + $0x18] sm:$0xff]
    %v59 = vld [vmem:[%s6 + $0x20] sm:$0xff]
    %v60 = vld [vmem:[%s6 + $0x28] sm:$0xff]
    %v61 = vld [vmem:[%s6 + $0x30] sm:$0xff]
    %v62 = vld [vmem:[%s6 + $0x38] sm:$0xff]
    %v63 = vmul.f32 %v47, %v47
    %v64 = vmul.f32 %v48, %v48
    %v65 = vmul.f32 %v49, %v49
    %v66 = vmul.f32 %v50, %v50
    %v67 = vmul.f32 %v51, %v51
    %v68 = vmul.f32 %v52, %v52
    %v69 = vmul.f32 %v53, %v53
    %v70 = vmul.f32 %v54, %v54
    %v71 = vmul.f32 %v55, %v55
    %v72 = vmul.f32 %v56, %v56
    %v73 = vmul.f32 %v57, %v57
    %v74 = vmul.f32 %v58, %v58
    %v75 = vmul.f32 %v59, %v59
    %v76 = vmul.f32 %v60, %v60
    %v77 = vmul.f32 %v61, %v61
    %v78 = vmul.f32 %v62, %v62
    %v79 = vmul.f32 %v47, %v55
    %v80 = vmul.f32 %v48, %v56
    %v81 = vmul.f32 %v49, %v57
    %v82 = vmul.f32 %v50, %v58
    %v83 = vmul.f32 %v51, %v59
    %v84 = vmul.f32 %v52, %v60
    %v85 = vmul.f32 %v53, %v61
    %v86 = vmul.f32 %v54, %v62
    %v87 = vld [vmem:[%s2] sm:$0xff]
    %v88 = vld [vmem:[%s2 + $0x8] sm:$0xff]
    %v89 = vld [vmem:[%s2 + $0x10] sm:$0xff]
    %v90 = vld [vmem:[%s2 + $0x18] sm:$0xff]
    %v91 = vld [vmem:[%s2 + $0x20] sm:$0xff]
    %v92 = vld [vmem:[%s2 + $0x28] sm:$0xff]
    %v93 = vld [vmem:[%s2 + $0x30] sm:$0xff]
    %v94 = vld [vmem:[%s2 + $0x38] sm:$0xff]
    %v95 = vld [vmem:[%s2 + $0x40] sm:$0xff]
    %v96 = vld [vmem:[%s2 + $0x48] sm:$0xff]
    %v97 = vld [vmem:[%s2 + $0x50] sm:$0xff]
    %v98 = vld [vmem:[%s2 + $0x58] sm:$0xff]
    %v99 = vld [vmem:[%s2 + $0x60] sm:$0xff]
    %v100 = vld [vmem:[%s2 + $0x68] sm:$0xff]
    %v101 = vld [vmem:[%s2 + $0x70] sm:$0xff]
    %v102 = vld [vmem:[%s2 + $0x78] sm:$0xff]
    %v103 = vld [vmem:[%s2 + $0x80] sm:$0xff]
    %v104 = vld [vmem:[%s2 + $0x88] sm:$0xff]
    %v105 = vld [vmem:[%s2 + $0x90] sm:$0xff]
    %v106 = vld [vmem:[%s2 + $0x98] sm:$0xff]
    %v107 = vld [vmem:[%s2 + $0xa0] sm:$0xff]
    %v108 = vld [vmem:[%s2 + $0xa8] sm:$0xff]
    %v109 = vld [vmem:[%s2 + $0xb0] sm:$0xff]
    %v110 = vld [vmem:[%s2 + $0xb8] sm:$0xff]
    %v111 = vld [vmem:[%s2 + $0xc0] sm:$0xff]
    %v112 = vld [vmem:[%s2 + $0xc8] sm:$0xff]
    %v113 = vld [vmem:[%s2 + $0xd0] sm:$0xff]
    %v114 = vld [vmem:[%s2 + $0xd8] sm:$0xff]
    %v115 = vld [vmem:[%s2 + $0xe0] sm:$0xff]
    %v116 = vld [vmem:[%s2 + $0xe8] sm:$0xff]
    %v117 = vld [vmem:[%s2 + $0xf0] sm:$0xff]
    %v118 = vld [vmem:[%s2 + $0xf8] sm:$0xff]
    %v119 = vld [vmem:[%s2 + $0x100] sm:$0xff]
    %v120 = vld [vmem:[%s2 + $0x108] sm:$0xff]
    %v121 = vld [vmem:[%s2 + $0x110] sm:$0xff]
    %v122 = vld [vmem:[%s2 + $0x118] sm:$0xff]
    %v123 = vld [vmem:[%s2 + $0x120] sm:$0xff]
    %v124 = vld [vmem:[%s2 + $0x128] sm:$0xff]
    %v125 = vld [vmem:[%s2 + $0x130] sm:$0xff]
    %v126 = vld [vmem:[%s2 + $0x138] sm:$0xff]
    %v127 = vld [vmem:[%s2 + $0x140] sm:$0xff]
    %v128 = vld [vmem:[%s2 + $0x148] sm:$0xff]
    %v129 = vld [vmem:[%s2 + $0x150] sm:$0xff]
    %v130 = vld [vmem:[%s2 + $0x158] sm:$0xff]
    %v131 = vld [vmem:[%s2 + $0x160] sm:$0xff]
    %v132 = vld [vmem:[%s2 + $0x168] sm:$0xff]
    %v133 = vld [vmem:[%s2 + $0x170] sm:$0xff]
    %v134 = vld [vmem:[%s2 + $0x178] sm:$0xff]
    %vm135 = vcmask 523264
    %v137 = vsel %vm135, %v48, 0
    %v140 = vsel %vm135, %v50, 0
    %v143 = vsel %vm135, %v52, 0
    %v146 = vsel %vm135, %v54, 0
    %v149 = vsel %vm135, %v56, 0
    %v152 = vsel %vm135, %v58, 0
    %v155 = vsel %vm135, %v60, 0
    %v158 = vsel %vm135, %v62, 0
    %v161 = vsel %vm135, %v64, 0
    %v164 = vsel %vm135, %v66, 0
    %v167 = vsel %vm135, %v68, 0
    %v170 = vsel %vm135, %v70, 0
    %v173 = vsel %vm135, %v72, 0
    %v176 = vsel %vm135, %v74, 0
    %v179 = vsel %vm135, %v76, 0
    %v182 = vsel %vm135, %v78, 0
    %v185 = vsel %vm135, %v80, 0
    %v188 = vsel %vm135, %v82, 0
    %v191 = vsel %vm135, %v84, 0
    %v194 = vsel %vm135, %v86, 0
    %196 = vmatpush.msra.mxu0 %v117
    %197 = vmatpush.msra.mxu0 %v115
    %198 = vmatpush.msra.mxu0 %v113
    %199 = vmatpush.msra.mxu0 %v111
    %200 = vmatpush.msra.mxu0 %v109
    %201 = vmatpush.msra.mxu0 %v107
    %202 = vmatpush.msra.mxu0 %v105
    %203 = vmatpush.msra.mxu0 %v103
    %204 = vmatpush.msra.mxu0 %v101
    %205 = vmatpush.msra.mxu0 %v99
    %206 = vmatpush.msra.mxu0 %v97
    %207 = vmatpush.msra.mxu0 %v95
    %208 = vmatpush.msra.mxu0 %v93
    %209 = vmatpush.msra.mxu0 %v91
    %210 = vmatpush.msra.mxu0 %v89
    %211 = vmatpush.msra.mxu0 %v87
    %212 = vmatmul.f32.gmra.mxu0 %v47
    %v213 = vpop.f32.mrf.mxu0
    %v214 = vadd.f32 0.0, %v213
    %215 = vmatmul.f32.gmra.mxu0 %v49
    %v216 = vpop.f32.mrf.mxu0
    %v217 = vadd.f32 0.0, %v216
    %218 = vmatmul.f32.gmra.mxu0 %v51
    %v219 = vpop.f32.mrf.mxu0
    %v220 = vadd.f32 0.0, %v219
    %221 = vmatmul.f32.gmra.mxu0 %v53
    %v222 = vpop.f32.mrf.mxu0
    %v223 = vadd.f32 0.0, %v222
    %224 = vmatmul.f32.gmra.mxu0 %v55
    %v225 = vpop.f32.mrf.mxu0
    %v226 = vadd.f32 0.0, %v225
    %227 = vmatmul.f32.gmra.mxu0 %v57
    %v228 = vpop.f32.mrf.mxu0
    %v229 = vadd.f32 0.0, %v228
    %230 = vmatmul.f32.gmra.mxu0 %v59
    %v231 = vpop.f32.mrf.mxu0
    %v232 = vadd.f32 0.0, %v231
    %233 = vmatmul.f32.gmra.mxu0 %v61
    %v234 = vpop.f32.mrf.mxu0
    %v235 = vadd.f32 0.0, %v234
    %236 = vmatmul.f32.gmra.mxu0 %v63
    %v237 = vpop.f32.mrf.mxu0
    %v238 = vadd.f32 0.0, %v237
    %239 = vmatmul.f32.gmra.mxu0 %v65
    %v240 = vpop.f32.mrf.mxu0
    %v241 = vadd.f32 0.0, %v240
    %242 = vmatmul.f32.gmra.mxu0 %v67
    %v243 = vpop.f32.mrf.mxu0
    %v244 = vadd.f32 0.0, %v243
    %245 = vmatmul.f32.gmra.mxu0 %v69
    %v246 = vpop.f32.mrf.mxu0
    %v247 = vadd.f32 0.0, %v246
    %248 = vmatmul.f32.gmra.mxu0 %v71
    %v249 = vpop.f32.mrf.mxu0
    %v250 = vadd.f32 0.0, %v249
    %251 = vmatmul.f32.gmra.mxu0 %v73
    %v252 = vpop.f32.mrf.mxu0
    %v253 = vadd.f32 0.0, %v252
    %254 = vmatmul.f32.gmra.mxu0 %v75
    %v255 = vpop.f32.mrf.mxu0
    %v256 = vadd.f32 0.0, %v255
    %257 = vmatmul.f32.gmra.mxu0 %v77
    %v258 = vpop.f32.mrf.mxu0
    %v259 = vadd.f32 0.0, %v258
    %260 = vmatmul.f32.gmra.mxu0 %v79
    %v261 = vpop.f32.mrf.mxu0
    %v262 = vadd.f32 0.0, %v261
    %263 = vmatmul.f32.gmra.mxu0 %v81
    %v264 = vpop.f32.mrf.mxu0
    %v265 = vadd.f32 0.0, %v264
    %266 = vmatmul.f32.gmra.mxu0 %v83
    %v267 = vpop.f32.mrf.mxu0
    %v268 = vadd.f32 0.0, %v267
    %269 = vmatmul.f32.gmra.mxu0 %v85
    %v270 = vpop.f32.mrf.mxu0
    %v271 = vadd.f32 0.0, %v270
    %272 = vdwg.mxu0
    %273 = vmatpush.msra.mxu0 0.0
    %274 = vmatpush.msra.mxu0 0.0
    %275 = vmatpush.msra.mxu0 0.0
    %276 = vmatpush.msra.mxu0 0.0
    %277 = vmatpush.msra.mxu0 0.0
    %278 = vmatpush.msra.mxu0 0.0
    %279 = vmatpush.msra.mxu0 0.0
    %280 = vmatpush.msra.mxu0 0.0
    %281 = vmatpush.msra.mxu0 %v133
    %282 = vmatpush.msra.mxu0 %v131
    %283 = vmatpush.msra.mxu0 %v129
    %284 = vmatpush.msra.mxu0 %v127
    %285 = vmatpush.msra.mxu0 %v125
    %286 = vmatpush.msra.mxu0 %v123
    %287 = vmatpush.msra.mxu0 %v121
    %288 = vmatpush.msra.mxu0 %v119
    %289 = vmatmul.f32.gmra.mxu0 %v137
    %v290 = vpop.f32.mrf.mxu0
    %v291 = vadd.f32 %v214, %v290
    %292 = vmatmul.f32.gmra.mxu0 %v140
    %v293 = vpop.f32.mrf.mxu0
    %v294 = vadd.f32 %v217, %v293
    %295 = vmatmul.f32.gmra.mxu0 %v143
    %v296 = vpop.f32.mrf.mxu0
    %v297 = vadd.f32 %v220, %v296
    %298 = vmatmul.f32.gmra.mxu0 %v146
    %v299 = vpop.f32.mrf.mxu0
    %v300 = vadd.f32 %v223, %v299
    %301 = vmatmul.f32.gmra.mxu0 %v149
    %v302 = vpop.f32.mrf.mxu0
    %v303 = vadd.f32 %v226, %v302
    %304 = vmatmul.f32.gmra.mxu0 %v152
    %v305 = vpop.f32.mrf.mxu0
    %v306 = vadd.f32 %v229, %v305
    %307 = vmatmul.f32.gmra.mxu0 %v155
    %v308 = vpop.f32.mrf.mxu0
    %v309 = vadd.f32 %v232, %v308
    %310 = vmatmul.f32.gmra.mxu0 %v158
    %v311 = vpop.f32.mrf.mxu0
    %v312 = vadd.f32 %v235, %v311
    %313 = vmatmul.f32.gmra.mxu0 %v161
    %v314 = vpop.f32.mrf.mxu0
    %v315 = vadd.f32 %v238, %v314
    %316 = vmatmul.f32.gmra.mxu0 %v164
    %v317 = vpop.f32.mrf.mxu0
    %v318 = vadd.f32 %v241, %v317
    %319 = vmatmul.f32.gmra.mxu0 %v167
    %v320 = vpop.f32.mrf.mxu0
    %v321 = vadd.f32 %v244, %v320
    %322 = vmatmul.f32.gmra.mxu0 %v170
    %v323 = vpop.f32.mrf.mxu0
    %v324 = vadd.f32 %v247, %v323
    %325 = vmatmul.f32.gmra.mxu0 %v173
    %v326 = vpop.f32.mrf.mxu0
    %v327 = vadd.f32 %v250, %v326
    %328 = vmatmul.f32.gmra.mxu0 %v176
    %v329 = vpop.f32.mrf.mxu0
    %v330 = vadd.f32 %v253, %v329
    %331 = vmatmul.f32.gmra.mxu0 %v179
    %v332 = vpop.f32.mrf.mxu0
    %v333 = vadd.f32 %v256, %v332
    %334 = vmatmul.f32.gmra.mxu0 %v182
    %v335 = vpop.f32.mrf.mxu0
    %v336 = vadd.f32 %v259, %v335
    %337 = vmatmul.f32.gmra.mxu0 %v185
    %v338 = vpop.f32.mrf.mxu0
    %v339 = vadd.f32 %v262, %v338
    %340 = vmatmul.f32.gmra.mxu0 %v188
    %v341 = vpop.f32.mrf.mxu0
    %v342 = vadd.f32 %v265, %v341
    %343 = vmatmul.f32.gmra.mxu0 %v191
    %v344 = vpop.f32.mrf.mxu0
    %v345 = vadd.f32 %v268, %v344
    %346 = vmatmul.f32.gmra.mxu0 %v194
    %v347 = vpop.f32.mrf.mxu0
    %v348 = vadd.f32 %v271, %v347
    %349 = vdwg.mxu0
    %350 = vmatpush.msra.mxu0 %v118
    %351 = vmatpush.msra.mxu0 %v116
    %352 = vmatpush.msra.mxu0 %v114
    %353 = vmatpush.msra.mxu0 %v112
    %354 = vmatpush.msra.mxu0 %v110
    %355 = vmatpush.msra.mxu0 %v108
    %356 = vmatpush.msra.mxu0 %v106
    %357 = vmatpush.msra.mxu0 %v104
    %358 = vmatpush.msra.mxu0 %v102
    %359 = vmatpush.msra.mxu0 %v100
    %360 = vmatpush.msra.mxu0 %v98
    %361 = vmatpush.msra.mxu0 %v96
    %362 = vmatpush.msra.mxu0 %v94
    %363 = vmatpush.msra.mxu0 %v92
    %364 = vmatpush.msra.mxu0 %v90
    %365 = vmatpush.msra.mxu0 %v88
    %366 = vmatmul.f32.gmra.mxu0 %v47
    %v367 = vpop.f32.mrf.mxu0
    %v368 = vadd.f32 0.0, %v367
    %369 = vmatmul.f32.gmra.mxu0 %v49
    %v370 = vpop.f32.mrf.mxu0
    %v371 = vadd.f32 0.0, %v370
    %372 = vmatmul.f32.gmra.mxu0 %v51
    %v373 = vpop.f32.mrf.mxu0
    %v374 = vadd.f32 0.0, %v373
    %375 = vmatmul.f32.gmra.mxu0 %v53
    %v376 = vpop.f32.mrf.mxu0
    %v377 = vadd.f32 0.0, %v376
    %378 = vmatmul.f32.gmra.mxu0 %v55
    %v379 = vpop.f32.mrf.mxu0
    %v380 = vadd.f32 0.0, %v379
    %381 = vmatmul.f32.gmra.mxu0 %v57
    %v382 = vpop.f32.mrf.mxu0
    %v383 = vadd.f32 0.0, %v382
    %384 = vmatmul.f32.gmra.mxu0 %v59
    %v385 = vpop.f32.mrf.mxu0
    %v386 = vadd.f32 0.0, %v385
    %387 = vmatmul.f32.gmra.mxu0 %v61
    %v388 = vpop.f32.mrf.mxu0
    %v389 = vadd.f32 0.0, %v388
    %390 = vmatmul.f32.gmra.mxu0 %v63
    %v391 = vpop.f32.mrf.mxu0
    %v392 = vadd.f32 0.0, %v391
    %393 = vmatmul.f32.gmra.mxu0 %v65
    %v394 = vpop.f32.mrf.mxu0
    %v395 = vadd.f32 0.0, %v394
    %396 = vmatmul.f32.gmra.mxu0 %v67
    %v397 = vpop.f32.mrf.mxu0
    %v398 = vadd.f32 0.0, %v397
    %399 = vmatmul.f32.gmra.mxu0 %v69
    %v400 = vpop.f32.mrf.mxu0
    %v401 = vadd.f32 0.0, %v400
    %402 = vmatmul.f32.gmra.mxu0 %v71
    %v403 = vpop.f32.mrf.mxu0
    %v404 = vadd.f32 0.0, %v403
    %405 = vmatmul.f32.gmra.mxu0 %v73
    %v406 = vpop.f32.mrf.mxu0
    %v407 = vadd.f32 0.0, %v406
    %408 = vmatmul.f32.gmra.mxu0 %v75
    %v409 = vpop.f32.mrf.mxu0
    %v410 = vadd.f32 0.0, %v409
    %411 = vmatmul.f32.gmra.mxu0 %v77
    %v412 = vpop.f32.mrf.mxu0
    %v413 = vadd.f32 0.0, %v412
    %414 = vmatmul.f32.gmra.mxu0 %v79
    %v415 = vpop.f32.mrf.mxu0
    %v416 = vadd.f32 0.0, %v415
    %417 = vmatmul.f32.gmra.mxu0 %v81
    %v418 = vpop.f32.mrf.mxu0
    %v419 = vadd.f32 0.0, %v418
    %420 = vmatmul.f32.gmra.mxu0 %v83
    %v421 = vpop.f32.mrf.mxu0
    %v422 = vadd.f32 0.0, %v421
    %423 = vmatmul.f32.gmra.mxu0 %v85
    %v424 = vpop.f32.mrf.mxu0
    %v425 = vadd.f32 0.0, %v424
    %426 = vdwg.mxu0
    %427 = vmatpush.msra.mxu0 0.0
    %428 = vmatpush.msra.mxu0 0.0
    %429 = vmatpush.msra.mxu0 0.0
    %430 = vmatpush.msra.mxu0 0.0
    %431 = vmatpush.msra.mxu0 0.0
    %432 = vmatpush.msra.mxu0 0.0
    %433 = vmatpush.msra.mxu0 0.0
    %434 = vmatpush.msra.mxu0 0.0
    %435 = vmatpush.msra.mxu0 %v134
    %436 = vmatpush.msra.mxu0 %v132
    %437 = vmatpush.msra.mxu0 %v130
    %438 = vmatpush.msra.mxu0 %v128
    %439 = vmatpush.msra.mxu0 %v126
    %440 = vmatpush.msra.mxu0 %v124
    %441 = vmatpush.msra.mxu0 %v122
    %442 = vmatpush.msra.mxu0 %v120
    %443 = vmatmul.f32.gmra.mxu0 %v137
    %v444 = vpop.f32.mrf.mxu0
    %v445 = vadd.f32 %v368, %v444
    %446 = vmatmul.f32.gmra.mxu0 %v140
    %v447 = vpop.f32.mrf.mxu0
    %v448 = vadd.f32 %v371, %v447
    %449 = vmatmul.f32.gmra.mxu0 %v143
    %v450 = vpop.f32.mrf.mxu0
    %v451 = vadd.f32 %v374, %v450
    %452 = vmatmul.f32.gmra.mxu0 %v146
    %v453 = vpop.f32.mrf.mxu0
    %v454 = vadd.f32 %v377, %v453
    %455 = vmatmul.f32.gmra.mxu0 %v149
    %v456 = vpop.f32.mrf.mxu0
    %v457 = vadd.f32 %v380, %v456
    %458 = vmatmul.f32.gmra.mxu0 %v152
    %v459 = vpop.f32.mrf.mxu0
    %v460 = vadd.f32 %v383, %v459
    %461 = vmatmul.f32.gmra.mxu0 %v155
    %v462 = vpop.f32.mrf.mxu0
    %v463 = vadd.f32 %v386, %v462
    %464 = vmatmul.f32.gmra.mxu0 %v158
    %v465 = vpop.f32.mrf.mxu0
    %v466 = vadd.f32 %v389, %v465
    %467 = vmatmul.f32.gmra.mxu0 %v161
    %v468 = vpop.f32.mrf.mxu0
    %v469 = vadd.f32 %v392, %v468
    %470 = vmatmul.f32.gmra.mxu0 %v164
    %v471 = vpop.f32.mrf.mxu0
    %v472 = vadd.f32 %v395, %v471
    %473 = vmatmul.f32.gmra.mxu0 %v167
    %v474 = vpop.f32.mrf.mxu0
    %v475 = vadd.f32 %v398, %v474
    %476 = vmatmul.f32.gmra.mxu0 %v170
    %v477 = vpop.f32.mrf.mxu0
    %v478 = vadd.f32 %v401, %v477
    %479 = vmatmul.f32.gmra.mxu0 %v173
    %v480 = vpop.f32.mrf.mxu0
    %v481 = vadd.f32 %v404, %v480
    %482 = vmatmul.f32.gmra.mxu0 %v176
    %v483 = vpop.f32.mrf.mxu0
    %v484 = vadd.f32 %v407, %v483
    %485 = vmatmul.f32.gmra.mxu0 %v179
    %v486 = vpop.f32.mrf.mxu0
    %v487 = vadd.f32 %v410, %v486
    %488 = vmatmul.f32.gmra.mxu0 %v182
    %v489 = vpop.f32.mrf.mxu0
    %v490 = vadd.f32 %v413, %v489
    %491 = vmatmul.f32.gmra.mxu0 %v185
    %v492 = vpop.f32.mrf.mxu0
    %v493 = vadd.f32 %v416, %v492
    %494 = vmatmul.f32.gmra.mxu0 %v188
    %v495 = vpop.f32.mrf.mxu0
    %v496 = vadd.f32 %v419, %v495
    %497 = vmatmul.f32.gmra.mxu0 %v191
    %v498 = vpop.f32.mrf.mxu0
    %v499 = vadd.f32 %v422, %v498
    %500 = vmatmul.f32.gmra.mxu0 %v194
    %v501 = vpop.f32.mrf.mxu0
    %v502 = vadd.f32 %v425, %v501
    %503 = vdwg.mxu0
    %512 = vrot.lane.b32.xlu0 %v303, 4
    %v513 = vpop.permute.xlu0 %512
    %514 = vrot.lane.b32.xlu0 %v457, 4
    %v515 = vpop.permute.xlu0 %514
    %516 = vrot.lane.b32.xlu0 %v306, 4
    %v517 = vpop.permute.xlu0 %516
    %518 = vrot.lane.b32.xlu0 %v460, 4
    %v519 = vpop.permute.xlu0 %518
    %520 = vrot.lane.b32.xlu0 %v309, 4
    %v521 = vpop.permute.xlu0 %520
    %522 = vrot.lane.b32.xlu0 %v463, 4
    %v523 = vpop.permute.xlu0 %522
    %524 = vrot.lane.b32.xlu0 %v312, 4
    %v525 = vpop.permute.xlu0 %524
    %526 = vrot.lane.b32.xlu0 %v466, 4
    %v527 = vpop.permute.xlu0 %526
    %vm528 = vcmask 31744
    %v529 = vsel %vm528, %v513, %v515
    %v530 = vsel %vm528, %v517, %v519
    %v531 = vsel %vm528, %v521, %v523
    %v532 = vsel %vm528, %v525, %v527
    %549 = vrot.lane.b32.xlu0 %v315, 8
    %v550 = vpop.permute.xlu0 %549
    %551 = vrot.lane.b32.xlu0 %v469, 8
    %v552 = vpop.permute.xlu0 %551
    %553 = vrot.lane.b32.xlu0 %v318, 8
    %v554 = vpop.permute.xlu0 %553
    %555 = vrot.lane.b32.xlu0 %v472, 8
    %v556 = vpop.permute.xlu0 %555
    %557 = vrot.lane.b32.xlu0 %v321, 8
    %v558 = vpop.permute.xlu0 %557
    %559 = vrot.lane.b32.xlu0 %v475, 8
    %v560 = vpop.permute.xlu0 %559
    %561 = vrot.lane.b32.xlu0 %v324, 8
    %v562 = vpop.permute.xlu0 %561
    %563 = vrot.lane.b32.xlu0 %v478, 8
    %v564 = vpop.permute.xlu0 %563
    %vm565 = vcmask 64512
    %v566 = vsel %vm565, %v550, %v552
    %v567 = vsel %vm565, %v554, %v556
    %v568 = vsel %vm565, %v558, %v560
    %v569 = vsel %vm565, %v562, %v564
    %586 = vrot.lane.b32.xlu0 %v327, 12
    %v587 = vpop.permute.xlu0 %586
    %588 = vrot.lane.b32.xlu0 %v481, 12
    %v589 = vpop.permute.xlu0 %588
    %590 = vrot.lane.b32.xlu0 %v330, 12
    %v591 = vpop.permute.xlu0 %590
    %592 = vrot.lane.b32.xlu0 %v484, 12
    %v593 = vpop.permute.xlu0 %592
    %594 = vrot.lane.b32.xlu0 %v333, 12
    %v595 = vpop.permute.xlu0 %594
    %596 = vrot.lane.b32.xlu0 %v487, 12
    %v597 = vpop.permute.xlu0 %596
    %598 = vrot.lane.b32.xlu0 %v336, 12
    %v599 = vpop.permute.xlu0 %598
    %600 = vrot.lane.b32.xlu0 %v490, 12
    %v601 = vpop.permute.xlu0 %600
    %vm602 = vcmask 97280
    %v603 = vsel %vm602, %v587, %v589
    %v604 = vsel %vm602, %v591, %v593
    %v605 = vsel %vm602, %v595, %v597
    %v606 = vsel %vm602, %v599, %v601
    %623 = vrot.lane.b32.xlu0 %v339, 16
    %v624 = vpop.permute.xlu0 %623
    %625 = vrot.lane.b32.xlu0 %v493, 16
    %v626 = vpop.permute.xlu0 %625
    %627 = vrot.lane.b32.xlu0 %v342, 16
    %v628 = vpop.permute.xlu0 %627
    %629 = vrot.lane.b32.xlu0 %v496, 16
    %v630 = vpop.permute.xlu0 %629
    %631 = vrot.lane.b32.xlu0 %v345, 16
    %v632 = vpop.permute.xlu0 %631
    %633 = vrot.lane.b32.xlu0 %v499, 16
    %v634 = vpop.permute.xlu0 %633
    %635 = vrot.lane.b32.xlu0 %v348, 16
    %v636 = vpop.permute.xlu0 %635
    %637 = vrot.lane.b32.xlu0 %v502, 16
    %v638 = vpop.permute.xlu0 %637
    %vm639 = vcmask 130048
    %v640 = vsel %vm639, %v624, %v626
    %v641 = vsel %vm639, %v628, %v630
    %v642 = vsel %vm639, %v632, %v634
    %v643 = vsel %vm639, %v636, %v638
    %v652 = vsel %vm528, %v445, %v513
    %v653 = vsel %vm528, %v448, %v517
    %v654 = vsel %vm528, %v451, %v521
    %v655 = vsel %vm528, %v454, %v525
    %v656 = vsel %vm565, %v529, %v550
    %v657 = vsel %vm565, %v530, %v554
    %v658 = vsel %vm565, %v531, %v558
    %v659 = vsel %vm565, %v532, %v562
    %v660 = vsel %vm602, %v566, %v587
    %v661 = vsel %vm602, %v567, %v591
    %v662 = vsel %vm602, %v568, %v595
    %v663 = vsel %vm602, %v569, %v599
    %v664 = vsel %vm639, %v603, %v624
    %v665 = vsel %vm639, %v604, %v628
    %v666 = vsel %vm639, %v605, %v632
    %v667 = vsel %vm639, %v606, %v636
    %v668 = vld [vmem:[%s1] sm:$0xff]
    %v669 = vld [vmem:[%s1 + $0x8] sm:$0xff]
    %v670 = vld [vmem:[%s1 + $0x10] sm:$0x3f]
    %vm671 = vcmask 261120
    %v673 = vsel %vm671, %v668, 0
    %v676 = vsel %vm671, %v669, 0
    %v679 = vsel %vm671, %v670, 0
    %681 = vmatpush.msra.mxu0 0.0
    %682 = vmatpush.msra.mxu0 0.0
    %683 = vmatpush.msra.mxu0 0.0
    %684 = vmatpush.msra.mxu0 0.0
    %685 = vmatpush.msra.mxu0 0.0
    %686 = vmatpush.msra.mxu0 0.0
    %687 = vmatpush.msra.mxu0 0.0
    %688 = vmatpush.msra.mxu0 0.0
    %689 = vmatpush.msra.mxu0 0.0
    %690 = vmatpush.msra.mxu0 0.0
    %691 = vmatpush.msra.mxu0 0.0
    %692 = vmatpush.msra.mxu0 0.0
    %693 = vmatpush.msra.mxu0 %v300
    %694 = vmatpush.msra.mxu0 %v297
    %695 = vmatpush.msra.mxu0 %v294
    %696 = vmatpush.msra.mxu0 %v291
    %697 = vmatmul.f32.gmra.mxu0 %v673
    %v698 = vpop.f32.mrf.mxu0
    %v699 = vadd.f32 0.0, %v698
    %700 = vmatmul.f32.gmra.mxu0 %v676
    %v701 = vpop.f32.mrf.mxu0
    %v702 = vadd.f32 0.0, %v701
    %703 = vmatmul.f32.gmra.mxu0 %v679
    %v704 = vpop.f32.mrf.mxu0
    %v705 = vadd.f32 0.0, %v704
    %706 = vdwg.mxu0
    %707 = vmatpush.msra.mxu0 0.0
    %708 = vmatpush.msra.mxu0 0.0
    %709 = vmatpush.msra.mxu0 0.0
    %710 = vmatpush.msra.mxu0 0.0
    %711 = vmatpush.msra.mxu0 0.0
    %712 = vmatpush.msra.mxu0 0.0
    %713 = vmatpush.msra.mxu0 0.0
    %714 = vmatpush.msra.mxu0 0.0
    %715 = vmatpush.msra.mxu0 0.0
    %716 = vmatpush.msra.mxu0 0.0
    %717 = vmatpush.msra.mxu0 0.0
    %718 = vmatpush.msra.mxu0 0.0
    %719 = vmatpush.msra.mxu0 %v655
    %720 = vmatpush.msra.mxu0 %v654
    %721 = vmatpush.msra.mxu0 %v653
    %722 = vmatpush.msra.mxu0 %v652
    %723 = vmatmul.f32.gmra.mxu0 %v673
    %v724 = vpop.f32.mrf.mxu0
    %v725 = vadd.f32 0.0, %v724
    %726 = vmatmul.f32.gmra.mxu0 %v676
    %v727 = vpop.f32.mrf.mxu0
    %v728 = vadd.f32 0.0, %v727
    %729 = vmatmul.f32.gmra.mxu0 %v679
    %v730 = vpop.f32.mrf.mxu0
    %v731 = vadd.f32 0.0, %v730
    %732 = vdwg.mxu0
    %733 = vmatpush.msra.mxu0 0.0
    %734 = vmatpush.msra.mxu0 0.0
    %735 = vmatpush.msra.mxu0 0.0
    %736 = vmatpush.msra.mxu0 0.0
    %737 = vmatpush.msra.mxu0 0.0
    %738 = vmatpush.msra.mxu0 0.0
    %739 = vmatpush.msra.mxu0 0.0
    %740 = vmatpush.msra.mxu0 0.0
    %741 = vmatpush.msra.mxu0 0.0
    %742 = vmatpush.msra.mxu0 0.0
    %743 = vmatpush.msra.mxu0 0.0
    %744 = vmatpush.msra.mxu0 0.0
    %745 = vmatpush.msra.mxu0 %v659
    %746 = vmatpush.msra.mxu0 %v658
    %747 = vmatpush.msra.mxu0 %v657
    %748 = vmatpush.msra.mxu0 %v656
    %749 = vmatmul.f32.gmra.mxu0 %v673
    %v750 = vpop.f32.mrf.mxu0
    %v751 = vadd.f32 0.0, %v750
    %752 = vmatmul.f32.gmra.mxu0 %v676
    %v753 = vpop.f32.mrf.mxu0
    %v754 = vadd.f32 0.0, %v753
    %755 = vmatmul.f32.gmra.mxu0 %v679
    %v756 = vpop.f32.mrf.mxu0
    %v757 = vadd.f32 0.0, %v756
    %758 = vdwg.mxu0
    %759 = vmatpush.msra.mxu0 0.0
    %760 = vmatpush.msra.mxu0 0.0
    %761 = vmatpush.msra.mxu0 0.0
    %762 = vmatpush.msra.mxu0 0.0
    %763 = vmatpush.msra.mxu0 0.0
    %764 = vmatpush.msra.mxu0 0.0
    %765 = vmatpush.msra.mxu0 0.0
    %766 = vmatpush.msra.mxu0 0.0
    %767 = vmatpush.msra.mxu0 0.0
    %768 = vmatpush.msra.mxu0 0.0
    %769 = vmatpush.msra.mxu0 0.0
    %770 = vmatpush.msra.mxu0 0.0
    %771 = vmatpush.msra.mxu0 %v663
    %772 = vmatpush.msra.mxu0 %v662
    %773 = vmatpush.msra.mxu0 %v661
    %774 = vmatpush.msra.mxu0 %v660
    %775 = vmatmul.f32.gmra.mxu0 %v673
    %v776 = vpop.f32.mrf.mxu0
    %v777 = vadd.f32 0.0, %v776
    %778 = vmatmul.f32.gmra.mxu0 %v676
    %v779 = vpop.f32.mrf.mxu0
    %v780 = vadd.f32 0.0, %v779
    %781 = vmatmul.f32.gmra.mxu0 %v679
    %v782 = vpop.f32.mrf.mxu0
    %v783 = vadd.f32 0.0, %v782
    %784 = vdwg.mxu0
    %785 = vmatpush.msra.mxu0 0.0
    %786 = vmatpush.msra.mxu0 0.0
    %787 = vmatpush.msra.mxu0 0.0
    %788 = vmatpush.msra.mxu0 0.0
    %789 = vmatpush.msra.mxu0 0.0
    %790 = vmatpush.msra.mxu0 0.0
    %791 = vmatpush.msra.mxu0 0.0
    %792 = vmatpush.msra.mxu0 0.0
    %793 = vmatpush.msra.mxu0 0.0
    %794 = vmatpush.msra.mxu0 0.0
    %795 = vmatpush.msra.mxu0 0.0
    %796 = vmatpush.msra.mxu0 0.0
    %797 = vmatpush.msra.mxu0 %v667
    %798 = vmatpush.msra.mxu0 %v666
    %799 = vmatpush.msra.mxu0 %v665
    %800 = vmatpush.msra.mxu0 %v664
    %801 = vmatmul.f32.gmra.mxu0 %v673
    %v802 = vpop.f32.mrf.mxu0
    %v803 = vadd.f32 0.0, %v802
    %804 = vmatmul.f32.gmra.mxu0 %v676
    %v805 = vpop.f32.mrf.mxu0
    %v806 = vadd.f32 0.0, %v805
    %807 = vmatmul.f32.gmra.mxu0 %v679
    %v808 = vpop.f32.mrf.mxu0
    %v809 = vadd.f32 0.0, %v808
    %810 = vdwg.mxu0
    %811 = vmatpush.msra.mxu0 0.0
    %812 = vmatpush.msra.mxu0 0.0
    %813 = vmatpush.msra.mxu0 0.0
    %814 = vmatpush.msra.mxu0 0.0
    %815 = vmatpush.msra.mxu0 0.0
    %816 = vmatpush.msra.mxu0 0.0
    %817 = vmatpush.msra.mxu0 0.0
    %818 = vmatpush.msra.mxu0 0.0
    %819 = vmatpush.msra.mxu0 0.0
    %820 = vmatpush.msra.mxu0 0.0
    %821 = vmatpush.msra.mxu0 0.0
    %822 = vmatpush.msra.mxu0 0.0
    %823 = vmatpush.msra.mxu0 %v643
    %824 = vmatpush.msra.mxu0 %v642
    %825 = vmatpush.msra.mxu0 %v641
    %826 = vmatpush.msra.mxu0 %v640
    %827 = vmatmul.f32.gmra.mxu0 %v673
    %v828 = vpop.f32.mrf.mxu0
    %v829 = vadd.f32 0.0, %v828
    %830 = vmatmul.f32.gmra.mxu0 %v676
    %v831 = vpop.f32.mrf.mxu0
    %v832 = vadd.f32 0.0, %v831
    %833 = vmatmul.f32.gmra.mxu0 %v679
    %v834 = vpop.f32.mrf.mxu0
    %v835 = vadd.f32 0.0, %v834
    %836 = vdwg.mxu0
    %v837 = vmul.f32 %v699, %v699
    %v838 = vmul.f32 %v725, %v725
    %v839 = vmul.f32 %v702, %v702
    %v840 = vmul.f32 %v728, %v728
    %v841 = vmul.f32 %v705, %v705
    %v842 = vmul.f32 %v731, %v731
    %v843 = vmul.f32 %v751, %v751
    %v844 = vmul.f32 %v754, %v754
    %v845 = vmul.f32 %v757, %v757
    %852 = vrot.lane.b32.xlu0 %v725, 124
    %v853 = vpop.permute.xlu0 %852
    %854 = vrot.lane.b32.xlu0 %v751, 124
    %v855 = vpop.permute.xlu0 %854
    %856 = vrot.lane.b32.xlu0 %v728, 124
    %v857 = vpop.permute.xlu0 %856
    %858 = vrot.lane.b32.xlu0 %v754, 124
    %v859 = vpop.permute.xlu0 %858
    %860 = vrot.lane.b32.xlu0 %v731, 124
    %v861 = vpop.permute.xlu0 %860
    %862 = vrot.lane.b32.xlu0 %v757, 124
    %v863 = vpop.permute.xlu0 %862
    %vm864 = vcmask 1014784
    %v865 = vsel %vm864, %v853, %v855
    %v866 = vsel %vm864, %v857, %v859
    %v867 = vsel %vm864, %v861, %v863
    %v874 = vmul.f32 %v699, %v865
    %v875 = vmul.f32 %v725, %v855
    %v876 = vmul.f32 %v702, %v866
    %v877 = vmul.f32 %v728, %v859
    %v878 = vmul.f32 %v705, %v867
    %v879 = vmul.f32 %v731, %v863
    %886 = vrot.lane.b32.xlu0 %v837, 8
    %v887 = vpop.permute.xlu0 %886
    %888 = vrot.lane.b32.xlu0 %v838, 8
    %v889 = vpop.permute.xlu0 %888
    %890 = vrot.lane.b32.xlu0 %v839, 8
    %v891 = vpop.permute.xlu0 %890
    %892 = vrot.lane.b32.xlu0 %v840, 8
    %v893 = vpop.permute.xlu0 %892
    %894 = vrot.lane.b32.xlu0 %v841, 8
    %v895 = vpop.permute.xlu0 %894
    %896 = vrot.lane.b32.xlu0 %v842, 8
    %v897 = vpop.permute.xlu0 %896
    %v898 = vsel %vm565, %v887, %v889
    %v899 = vsel %vm565, %v891, %v893
    %v900 = vsel %vm565, %v895, %v897
    %v907 = vsub.f32 %v751, %v887
    %v908 = vsub.f32 %v777, %v898
    %v909 = vsub.f32 %v754, %v891
    %v910 = vsub.f32 %v780, %v899
    %v911 = vsub.f32 %v757, %v895
    %v912 = vsub.f32 %v783, %v900
    %916 = vrot.lane.b32.xlu0 %v843, 8
    %v917 = vpop.permute.xlu0 %916
    %918 = vrot.lane.b32.xlu0 %v844, 8
    %v919 = vpop.permute.xlu0 %918
    %920 = vrot.lane.b32.xlu0 %v845, 8
    %v921 = vpop.permute.xlu0 %920
    %v922 = vsel %vm565, %v889, %v917
    %v923 = vsel %vm565, %v893, %v919
    %v924 = vsel %vm565, %v897, %v921
    %v931 = vsub.f32 %v777, %v889
    %v932 = vsub.f32 %v803, %v922
    %v933 = vsub.f32 %v780, %v893
    %v934 = vsub.f32 %v806, %v923
    %v935 = vsub.f32 %v783, %v897
    %v936 = vsub.f32 %v809, %v924
    %943 = vrot.lane.b32.xlu0 %v874, 16
    %v944 = vpop.permute.xlu0 %943
    %945 = vrot.lane.b32.xlu0 %v875, 16
    %v946 = vpop.permute.xlu0 %945
    %947 = vrot.lane.b32.xlu0 %v876, 16
    %v948 = vpop.permute.xlu0 %947
    %949 = vrot.lane.b32.xlu0 %v877, 16
    %v950 = vpop.permute.xlu0 %949
    %951 = vrot.lane.b32.xlu0 %v878, 16
    %v952 = vpop.permute.xlu0 %951
    %953 = vrot.lane.b32.xlu0 %v879, 16
    %v954 = vpop.permute.xlu0 %953
    %v955 = vsel %vm639, %v944, %v946
    %v956 = vsel %vm639, %v948, %v950
    %v957 = vsel %vm639, %v952, %v954
    %v964 = vsub.f32 %v803, %v944
    %v965 = vsub.f32 %v829, %v955
    %v966 = vsub.f32 %v806, %v948
    %v967 = vsub.f32 %v832, %v956
    %v968 = vsub.f32 %v809, %v952
    %v969 = vsub.f32 %v835, %v957
    %v970 = vmul.f32 %v964, 2.0
    %v971 = vmul.f32 %v965, 2.0
    %v972 = vmul.f32 %v966, 2.0
    %v973 = vmul.f32 %v967, 2.0
    %v974 = vmul.f32 %v968, 2.0
    %v975 = vmul.f32 %v969, 2.0
    %v976 = vstv %s46
    %v977 = vadd.f32 %v970, %v976
    %v978 = vadd.f32 %v971, %v976
    %v979 = vadd.f32 %v972, %v976
    %v980 = vadd.f32 %v973, %v976
    %v981 = vadd.f32 %v974, %v976
    %v982 = vadd.f32 %v975, %v976
    %989 = vrot.lane.b32.xlu0 %v931, 124
    %v990 = vpop.permute.xlu0 %989
    %991 = vrot.lane.b32.xlu0 %v932, 124
    %v992 = vpop.permute.xlu0 %991
    %993 = vrot.lane.b32.xlu0 %v933, 124
    %v994 = vpop.permute.xlu0 %993
    %995 = vrot.lane.b32.xlu0 %v934, 124
    %v996 = vpop.permute.xlu0 %995
    %997 = vrot.lane.b32.xlu0 %v935, 124
    %v998 = vpop.permute.xlu0 %997
    %999 = vrot.lane.b32.xlu0 %v936, 124
    %v1000 = vpop.permute.xlu0 %999
    %v1001 = vsel %vm864, %v990, %v992
    %v1002 = vsel %vm864, %v994, %v996
    %v1003 = vsel %vm864, %v998, %v1000
    %v1010 = vadd.f32 %v907, %v1001
    %v1011 = vadd.f32 %v908, %v992
    %v1012 = vadd.f32 %v909, %v1002
    %v1013 = vadd.f32 %v910, %v996
    %v1014 = vadd.f32 %v911, %v1003
    %v1015 = vadd.f32 %v912, %v1000
    %v1016 = vadd.f32 %v1010, %v976
    %v1017 = vadd.f32 %v1011, %v976
    %v1018 = vadd.f32 %v1012, %v976
    %v1019 = vadd.f32 %v1013, %v976
    %v1020 = vadd.f32 %v1014, %v976
    %v1021 = vadd.f32 %v1015, %v976
    %1028 = vrot.lane.b32.xlu0 %v1016, 8
    %v1029 = vpop.permute.xlu0 %1028
    %1030 = vrot.lane.b32.xlu0 %v1017, 8
    %v1031 = vpop.permute.xlu0 %1030
    %1032 = vrot.lane.b32.xlu0 %v1018, 8
    %v1033 = vpop.permute.xlu0 %1032
    %1034 = vrot.lane.b32.xlu0 %v1019, 8
    %v1035 = vpop.permute.xlu0 %1034
    %1036 = vrot.lane.b32.xlu0 %v1020, 8
    %v1037 = vpop.permute.xlu0 %1036
    %1038 = vrot.lane.b32.xlu0 %v1021, 8
    %v1039 = vpop.permute.xlu0 %1038
    %v1040 = vsel %vm565, %v1029, %v1031
    %v1041 = vsel %vm565, %v1033, %v1035
    %v1042 = vsel %vm565, %v1037, %v1039
    %v1049 = vrcp.pop %v1029
    %v1050 = vmul.f32 %v1029, %v1049
    %v1051 = vsub.f32 1.0, %v1050
    %v1052 = vmul.f32 %v1049, %v1051
    %v1053 = vadd.f32 %v1049, %v1052
    %vm1054 = vweird.f32 %v1029
    %vm1055 = vweird.f32 %v1049
    %vm1056 = vmor %vm1054, %vm1055
    %v1057 = vsel %vm1056, %v1049, %v1053
    %v1058 = vand.u32 2147483647, %v1029
    %vm1059 = vcmp.eq.f32.partialorder %v1058, 8.507059e+37
    %v1060 = vand.u32 %v1029, 2147483648
    %v1061 = vor.u32 1.1754944e-38, %v1060
    %v1062 = vsel %vm1059, %v1061, %v1057
    %v1063 = vmul.f32 %v977, %v1062
    %v1064 = vrcp.pop %v1040
    %v1065 = vmul.f32 %v1040, %v1064
    %v1066 = vsub.f32 1.0, %v1065
    %v1067 = vmul.f32 %v1064, %v1066
    %v1068 = vadd.f32 %v1064, %v1067
    %vm1069 = vweird.f32 %v1040
    %vm1070 = vweird.f32 %v1064
    %vm1071 = vmor %vm1069, %vm1070
    %v1072 = vsel %vm1071, %v1064, %v1068
    %v1073 = vand.u32 2147483647, %v1040
    %vm1074 = vcmp.eq.f32.partialorder %v1073, 8.507059e+37
    %v1075 = vand.u32 %v1040, 2147483648
    %v1076 = vor.u32 1.1754944e-38, %v1075
    %v1077 = vsel %vm1074, %v1076, %v1072
    %v1078 = vmul.f32 %v978, %v1077
    %v1079 = vrcp.pop %v1033
    %v1080 = vmul.f32 %v1033, %v1079
    %v1081 = vsub.f32 1.0, %v1080
    %v1082 = vmul.f32 %v1079, %v1081
    %v1083 = vadd.f32 %v1079, %v1082
    %vm1084 = vweird.f32 %v1033
    %vm1085 = vweird.f32 %v1079
    %vm1086 = vmor %vm1084, %vm1085
    %v1087 = vsel %vm1086, %v1079, %v1083
    %v1088 = vand.u32 2147483647, %v1033
    %vm1089 = vcmp.eq.f32.partialorder %v1088, 8.507059e+37
    %v1090 = vand.u32 %v1033, 2147483648
    %v1091 = vor.u32 1.1754944e-38, %v1090
    %v1092 = vsel %vm1089, %v1091, %v1087
    %v1093 = vmul.f32 %v979, %v1092
    %v1094 = vrcp.pop %v1041
    %v1095 = vmul.f32 %v1041, %v1094
    %v1096 = vsub.f32 1.0, %v1095
    %v1097 = vmul.f32 %v1094, %v1096
    %v1098 = vadd.f32 %v1094, %v1097
    %vm1099 = vweird.f32 %v1041
    %vm1100 = vweird.f32 %v1094
    %vm1101 = vmor %vm1099, %vm1100
    %v1102 = vsel %vm1101, %v1094, %v1098
    %v1103 = vand.u32 2147483647, %v1041
    %vm1104 = vcmp.eq.f32.partialorder %v1103, 8.507059e+37
    %v1105 = vand.u32 %v1041, 2147483648
    %v1106 = vor.u32 1.1754944e-38, %v1105
    %v1107 = vsel %vm1104, %v1106, %v1102
    %v1108 = vmul.f32 %v980, %v1107
    %v1109 = vrcp.pop %v1037
    %v1110 = vmul.f32 %v1037, %v1109
    %v1111 = vsub.f32 1.0, %v1110
    %v1112 = vmul.f32 %v1109, %v1111
    %v1113 = vadd.f32 %v1109, %v1112
    %vm1114 = vweird.f32 %v1037
    %vm1115 = vweird.f32 %v1109
    %vm1116 = vmor %vm1114, %vm1115
    %v1117 = vsel %vm1116, %v1109, %v1113
    %v1118 = vand.u32 2147483647, %v1037
    %vm1119 = vcmp.eq.f32.partialorder %v1118, 8.507059e+37
    %v1120 = vand.u32 %v1037, 2147483648
    %v1121 = vor.u32 1.1754944e-38, %v1120
    %v1122 = vsel %vm1119, %v1121, %v1117
    %v1123 = vmul.f32 %v981, %v1122
    %v1124 = vrcp.pop %v1042
    %v1125 = vmul.f32 %v1042, %v1124
    %v1126 = vsub.f32 1.0, %v1125
    %v1127 = vmul.f32 %v1124, %v1126
    %v1128 = vadd.f32 %v1124, %v1127
    %vm1129 = vweird.f32 %v1042
    %vm1130 = vweird.f32 %v1124
    %vm1131 = vmor %vm1129, %vm1130
    %v1132 = vsel %vm1131, %v1124, %v1128
    %v1133 = vand.u32 2147483647, %v1042
    %vm1134 = vcmp.eq.f32.partialorder %v1133, 8.507059e+37
    %v1135 = vand.u32 %v1042, 2147483648
    %v1136 = vor.u32 1.1754944e-38, %v1135
    %v1137 = vsel %vm1134, %v1136, %v1132
    %v1138 = vmul.f32 %v982, %v1137
    %v1139 = vmul.f32 %v874, 2.0
    %v1140 = vmul.f32 %v875, 2.0
    %v1141 = vmul.f32 %v876, 2.0
    %v1142 = vmul.f32 %v877, 2.0
    %v1143 = vmul.f32 %v878, 2.0
    %v1144 = vmul.f32 %v879, 2.0
    %v1145 = vstv %s45
    %v1146 = vadd.f32 %v1139, %v1145
    %v1147 = vadd.f32 %v1140, %v1145
    %v1148 = vadd.f32 %v1141, %v1145
    %v1149 = vadd.f32 %v1142, %v1145
    %v1150 = vadd.f32 %v1143, %v1145
    %v1151 = vadd.f32 %v1144, %v1145
    %1158 = vrot.lane.b32.xlu0 %v977, 112
    %v1159 = vpop.permute.xlu0 %1158
    %1160 = vrot.lane.b32.xlu0 %v978, 112
    %v1161 = vpop.permute.xlu0 %1160
    %1162 = vrot.lane.b32.xlu0 %v979, 112
    %v1163 = vpop.permute.xlu0 %1162
    %1164 = vrot.lane.b32.xlu0 %v980, 112
    %v1165 = vpop.permute.xlu0 %1164
    %1166 = vrot.lane.b32.xlu0 %v981, 112
    %v1167 = vpop.permute.xlu0 %1166
    %1168 = vrot.lane.b32.xlu0 %v982, 112
    %v1169 = vpop.permute.xlu0 %1168
    %vm1170 = vcmask 916480
    %v1171 = vsel %vm1170, %v1159, %v1161
    %v1172 = vsel %vm1170, %v1163, %v1165
    %v1173 = vsel %vm1170, %v1167, %v1169
    %v1180 = vmul.f32 %v1146, %v1171
    %v1181 = vmul.f32 %v1147, %v1161
    %v1182 = vmul.f32 %v1148, %v1172
    %v1183 = vmul.f32 %v1149, %v1165
    %v1184 = vmul.f32 %v1150, %v1173
    %v1185 = vmul.f32 %v1151, %v1169
    %1186 = vrot.lane.b32.xlu0 %v838, 124
    %v1187 = vpop.permute.xlu0 %1186
    %1188 = vrot.lane.b32.xlu0 %v843, 124
    %v1189 = vpop.permute.xlu0 %1188
    %1190 = vrot.lane.b32.xlu0 %v840, 124
    %v1191 = vpop.permute.xlu0 %1190
    %1192 = vrot.lane.b32.xlu0 %v844, 124
    %v1193 = vpop.permute.xlu0 %1192
    %1194 = vrot.lane.b32.xlu0 %v842, 124
    %v1195 = vpop.permute.xlu0 %1194
    %1196 = vrot.lane.b32.xlu0 %v845, 124
    %v1197 = vpop.permute.xlu0 %1196
    %v1198 = vsel %vm864, %v1187, %v1189
    %v1199 = vsel %vm864, %v1191, %v1193
    %v1200 = vsel %vm864, %v1195, %v1197
    %v1207 = vadd.f32 %v837, %v1198
    %v1208 = vadd.f32 %v838, %v1189
    %v1209 = vadd.f32 %v839, %v1199
    %v1210 = vadd.f32 %v840, %v1193
    %v1211 = vadd.f32 %v841, %v1200
    %v1212 = vadd.f32 %v842, %v1197
    %v1213 = vadd.f32 %v1207, %v1145
    %v1214 = vadd.f32 %v1208, %v1145
    %v1215 = vadd.f32 %v1209, %v1145
    %v1216 = vadd.f32 %v1210, %v1145
    %v1217 = vadd.f32 %v1211, %v1145
    %v1218 = vadd.f32 %v1212, %v1145
    %1219 = vrot.lane.b32.xlu0 %v1016, 120
    %v1220 = vpop.permute.xlu0 %1219
    %1221 = vrot.lane.b32.xlu0 %v1017, 120
    %v1222 = vpop.permute.xlu0 %1221
    %1223 = vrot.lane.b32.xlu0 %v1018, 120
    %v1224 = vpop.permute.xlu0 %1223
    %1225 = vrot.lane.b32.xlu0 %v1019, 120
    %v1226 = vpop.permute.xlu0 %1225
    %1227 = vrot.lane.b32.xlu0 %v1020, 120
    %v1228 = vpop.permute.xlu0 %1227
    %1229 = vrot.lane.b32.xlu0 %v1021, 120
    %v1230 = vpop.permute.xlu0 %1229
    %vm1231 = vcmask 982016
    %v1232 = vsel %vm1231, %v1220, %v1222
    %v1233 = vsel %vm1231, %v1224, %v1226
    %v1234 = vsel %vm1231, %v1228, %v1230
    %v1241 = vmul.f32 %v1213, %v1232
    %v1242 = vmul.f32 %v1214, %v1222
    %v1243 = vmul.f32 %v1215, %v1233
    %v1244 = vmul.f32 %v1216, %v1226
    %v1245 = vmul.f32 %v1217, %v1234
    %v1246 = vmul.f32 %v1218, %v1230
    %v1247 = vrcp.pop %v1241
    %v1248 = vmul.f32 %v1241, %v1247
    %v1249 = vsub.f32 1.0, %v1248
    %v1250 = vmul.f32 %v1247, %v1249
    %v1251 = vadd.f32 %v1247, %v1250
    %vm1252 = vweird.f32 %v1241
    %vm1253 = vweird.f32 %v1247
    %vm1254 = vmor %vm1252, %vm1253
    %v1255 = vsel %vm1254, %v1247, %v1251
    %v1256 = vand.u32 2147483647, %v1241
    %vm1257 = vcmp.eq.f32.partialorder %v1256, 8.507059e+37
    %v1258 = vand.u32 %v1241, 2147483648
    %v1259 = vor.u32 1.1754944e-38, %v1258
    %v1260 = vsel %vm1257, %v1259, %v1255
    %v1261 = vmul.f32 %v1180, %v1260
    %v1262 = vrcp.pop %v1242
    %v1263 = vmul.f32 %v1242, %v1262
    %v1264 = vsub.f32 1.0, %v1263
    %v1265 = vmul.f32 %v1262, %v1264
    %v1266 = vadd.f32 %v1262, %v1265
    %vm1267 = vweird.f32 %v1242
    %vm1268 = vweird.f32 %v1262
    %vm1269 = vmor %vm1267, %vm1268
    %v1270 = vsel %vm1269, %v1262, %v1266
    %v1271 = vand.u32 2147483647, %v1242
    %vm1272 = vcmp.eq.f32.partialorder %v1271, 8.507059e+37
    %v1273 = vand.u32 %v1242, 2147483648
    %v1274 = vor.u32 1.1754944e-38, %v1273
    %v1275 = vsel %vm1272, %v1274, %v1270
    %v1276 = vmul.f32 %v1181, %v1275
    %v1277 = vrcp.pop %v1243
    %v1278 = vmul.f32 %v1243, %v1277
    %v1279 = vsub.f32 1.0, %v1278
    %v1280 = vmul.f32 %v1277, %v1279
    %v1281 = vadd.f32 %v1277, %v1280
    %vm1282 = vweird.f32 %v1243
    %vm1283 = vweird.f32 %v1277
    %vm1284 = vmor %vm1282, %vm1283
    %v1285 = vsel %vm1284, %v1277, %v1281
    %v1286 = vand.u32 2147483647, %v1243
    %vm1287 = vcmp.eq.f32.partialorder %v1286, 8.507059e+37
    %v1288 = vand.u32 %v1243, 2147483648
    %v1289 = vor.u32 1.1754944e-38, %v1288
    %v1290 = vsel %vm1287, %v1289, %v1285
    %v1291 = vmul.f32 %v1182, %v1290
    %v1292 = vrcp.pop %v1244
    %v1293 = vmul.f32 %v1244, %v1292
    %v1294 = vsub.f32 1.0, %v1293
    %v1295 = vmul.f32 %v1292, %v1294
    %v1296 = vadd.f32 %v1292, %v1295
    %vm1297 = vweird.f32 %v1244
    %vm1298 = vweird.f32 %v1292
    %vm1299 = vmor %vm1297, %vm1298
    %v1300 = vsel %vm1299, %v1292, %v1296
    %v1301 = vand.u32 2147483647, %v1244
    %vm1302 = vcmp.eq.f32.partialorder %v1301, 8.507059e+37
    %v1303 = vand.u32 %v1244, 2147483648
    %v1304 = vor.u32 1.1754944e-38, %v1303
    %v1305 = vsel %vm1302, %v1304, %v1300
    %v1306 = vmul.f32 %v1183, %v1305
    %v1307 = vrcp.pop %v1245
    %v1308 = vmul.f32 %v1245, %v1307
    %v1309 = vsub.f32 1.0, %v1308
    %v1310 = vmul.f32 %v1307, %v1309
    %v1311 = vadd.f32 %v1307, %v1310
    %vm1312 = vweird.f32 %v1245
    %vm1313 = vweird.f32 %v1307
    %vm1314 = vmor %vm1312, %vm1313
    %v1315 = vsel %vm1314, %v1307, %v1311
    %v1316 = vand.u32 2147483647, %v1245
    %vm1317 = vcmp.eq.f32.partialorder %v1316, 8.507059e+37
    %v1318 = vand.u32 %v1245, 2147483648
    %v1319 = vor.u32 1.1754944e-38, %v1318
    %v1320 = vsel %vm1317, %v1319, %v1315
    %v1321 = vmul.f32 %v1184, %v1320
    %v1322 = vrcp.pop %v1246
    %v1323 = vmul.f32 %v1246, %v1322
    %v1324 = vsub.f32 1.0, %v1323
    %v1325 = vmul.f32 %v1322, %v1324
    %v1326 = vadd.f32 %v1322, %v1325
    %vm1327 = vweird.f32 %v1246
    %vm1328 = vweird.f32 %v1322
    %vm1329 = vmor %vm1327, %vm1328
    %v1330 = vsel %vm1329, %v1322, %v1326
    %v1331 = vand.u32 2147483647, %v1246
    %vm1332 = vcmp.eq.f32.partialorder %v1331, 8.507059e+37
    %v1333 = vand.u32 %v1246, 2147483648
    %v1334 = vor.u32 1.1754944e-38, %v1333
    %v1335 = vsel %vm1332, %v1334, %v1330
    %v1336 = vmul.f32 %v1185, %v1335
    %v1337 = vsel %vm528, %v1276, 0.0
    %v1338 = vadd.f32 %v1261, %v1337
    %v1339 = vadd.f32 %v1338, %v1291
    %v1340 = vsel %vm528, %v1306, 0.0
    %v1341 = vadd.f32 %v1339, %v1340
    %vm1342 = vcmask 1045504
    %v1343 = vsel %vm1342, %v1321, 0.0
    %v1344 = vadd.f32 %v1341, %v1343
    %vm1345 = vcmask 29696
    %v1346 = vsel %vm1345, %v1336, 0.0
    %v1347 = vadd.f32 %v1344, %v1346
    %1348 = vadd.xlane.f32.xlu0 %v1347
    %v1349 = vpop.xlane.xlu0 %1348
    %v1350 = vrot.slane %v1349, 4
    %v1351 = vadd.f32 %v1349, %v1350
    %v1352 = vrot.slane %v1351, 2
    %v1353 = vadd.f32 %v1351, %v1352
    %v1354 = vrot.slane %v1353, 1
    %v1355 = vadd.f32 %v1353, %v1354
    %s1356 = vtos %v1355
    %v1357 = vstv %s1356
    %1358 = vst [vmem:[%s7] sm:$0xff] %v1357
    %1365 = vrot.lane.b32.xlu0 %v1063, 112
    %v1366 = vpop.permute.xlu0 %1365
    %1367 = vrot.lane.b32.xlu0 %v1078, 112
    %v1368 = vpop.permute.xlu0 %1367
    %1369 = vrot.lane.b32.xlu0 %v1093, 112
    %v1370 = vpop.permute.xlu0 %1369
    %1371 = vrot.lane.b32.xlu0 %v1108, 112
    %v1372 = vpop.permute.xlu0 %1371
    %1373 = vrot.lane.b32.xlu0 %v1123, 112
    %v1374 = vpop.permute.xlu0 %1373
    %1375 = vrot.lane.b32.xlu0 %v1138, 112
    %v1376 = vpop.permute.xlu0 %1375
    %v1377 = vsel %vm1170, %v1366, %v1368
    %v1378 = vsel %vm1170, %v1370, %v1372
    %v1379 = vsel %vm1170, %v1374, %v1376
    %v1386 = vsel %vm528, %v1368, 0.0
    %v1387 = vadd.f32 %v1377, %v1386
    %v1388 = vadd.f32 %v1387, %v1378
    %v1389 = vsel %vm528, %v1372, 0.0
    %v1390 = vadd.f32 %v1388, %v1389
    %v1391 = vsel %vm1342, %v1379, 0.0
    %v1392 = vadd.f32 %v1390, %v1391
    %v1393 = vsel %vm1345, %v1376, 0.0
    %v1394 = vadd.f32 %v1392, %v1393
    %1395 = vadd.xlane.f32.xlu0 %v1394
    %v1396 = vpop.xlane.xlu0 %1395
    %v1397 = vrot.slane %v1396, 4
    %v1398 = vadd.f32 %v1396, %v1397
    %v1399 = vrot.slane %v1398, 2
    %v1400 = vadd.f32 %v1398, %v1399
    %v1401 = vrot.slane %v1400, 1
    %v1402 = vadd.f32 %v1400, %v1401
    %s1403 = vtos %v1402
    %v1404 = vstv %s1403
    %1405 = vst [vmem:[%s8] sm:$0xff] %v1404
    %v1406 = vld [vmem:[%s4] sm:$0xff]
    %v1407 = vld [vmem:[%s4 + $0x8] sm:$0xff]
    %v1408 = vld [vmem:[%s4 + $0x10] sm:$0xff]
    %v1409 = vld [vmem:[%s4 + $0x18] sm:$0xff]
    %v1410 = vld [vmem:[%s4 + $0x20] sm:$0xff]
    %v1411 = vld [vmem:[%s4 + $0x28] sm:$0xff]
    %v1412 = vld [vmem:[%s4 + $0x30] sm:$0xff]
    %v1413 = vld [vmem:[%s4 + $0x38] sm:$0xff]
    %v1414 = vld [vmem:[%s4 + $0x40] sm:$0xff]
    %v1415 = vld [vmem:[%s4 + $0x48] sm:$0xff]
    %v1416 = vld [vmem:[%s4 + $0x50] sm:$0xff]
    %v1417 = vld [vmem:[%s4 + $0x58] sm:$0xff]
    %v1418 = vld [vmem:[%s4 + $0x60] sm:$0xff]
    %v1419 = vld [vmem:[%s4 + $0x68] sm:$0xff]
    %v1420 = vld [vmem:[%s4 + $0x70] sm:$0xff]
    %v1421 = vld [vmem:[%s4 + $0x78] sm:$0xff]
    %v1422 = vld [vmem:[%s4 + $0x80] sm:$0xff]
    %v1423 = vld [vmem:[%s4 + $0x88] sm:$0xff]
    %v1424 = vld [vmem:[%s4 + $0x90] sm:$0xff]
    %v1425 = vld [vmem:[%s4 + $0x98] sm:$0xff]
    %v1426 = vld [vmem:[%s4 + $0xa0] sm:$0xff]
    %v1427 = vld [vmem:[%s4 + $0xa8] sm:$0xff]
    %v1428 = vld [vmem:[%s4 + $0xb0] sm:$0xff]
    %v1429 = vld [vmem:[%s4 + $0xb8] sm:$0xff]
    %1430 = vmatpush.msra.mxu0 %v1421
    %1431 = vmatpush.msra.mxu0 %v1420
    %1432 = vmatpush.msra.mxu0 %v1419
    %1433 = vmatpush.msra.mxu0 %v1418
    %1434 = vmatpush.msra.mxu0 %v1417
    %1435 = vmatpush.msra.mxu0 %v1416
    %1436 = vmatpush.msra.mxu0 %v1415
    %1437 = vmatpush.msra.mxu0 %v1414
    %1438 = vmatpush.msra.mxu0 %v1413
    %1439 = vmatpush.msra.mxu0 %v1412
    %1440 = vmatpush.msra.mxu0 %v1411
    %1441 = vmatpush.msra.mxu0 %v1410
    %1442 = vmatpush.msra.mxu0 %v1409
    %1443 = vmatpush.msra.mxu0 %v1408
    %1444 = vmatpush.msra.mxu0 %v1407
    %1445 = vmatpush.msra.mxu0 %v1406
    %1446 = vmatmul.f32.gmra.mxu0 %v47
    %v1447 = vpop.f32.mrf.mxu0
    %v1448 = vadd.f32 0.0, %v1447
    %1449 = vmatmul.f32.gmra.mxu0 %v49
    %v1450 = vpop.f32.mrf.mxu0
    %v1451 = vadd.f32 0.0, %v1450
    %1452 = vmatmul.f32.gmra.mxu0 %v51
    %v1453 = vpop.f32.mrf.mxu0
    %v1454 = vadd.f32 0.0, %v1453
    %1455 = vmatmul.f32.gmra.mxu0 %v53
    %v1456 = vpop.f32.mrf.mxu0
    %v1457 = vadd.f32 0.0, %v1456
    %1458 = vmatmul.f32.gmra.mxu0 %v55
    %v1459 = vpop.f32.mrf.mxu0
    %v1460 = vadd.f32 0.0, %v1459
    %1461 = vmatmul.f32.gmra.mxu0 %v57
    %v1462 = vpop.f32.mrf.mxu0
    %v1463 = vadd.f32 0.0, %v1462
    %1464 = vmatmul.f32.gmra.mxu0 %v59
    %v1465 = vpop.f32.mrf.mxu0
    %v1466 = vadd.f32 0.0, %v1465
    %1467 = vmatmul.f32.gmra.mxu0 %v61
    %v1468 = vpop.f32.mrf.mxu0
    %v1469 = vadd.f32 0.0, %v1468
    %1470 = vdwg.mxu0
    %1471 = vmatpush.msra.mxu0 0.0
    %1472 = vmatpush.msra.mxu0 0.0
    %1473 = vmatpush.msra.mxu0 0.0
    %1474 = vmatpush.msra.mxu0 0.0
    %1475 = vmatpush.msra.mxu0 0.0
    %1476 = vmatpush.msra.mxu0 0.0
    %1477 = vmatpush.msra.mxu0 0.0
    %1478 = vmatpush.msra.mxu0 0.0
    %1479 = vmatpush.msra.mxu0 %v1429
    %1480 = vmatpush.msra.mxu0 %v1428
    %1481 = vmatpush.msra.mxu0 %v1427
    %1482 = vmatpush.msra.mxu0 %v1426
    %1483 = vmatpush.msra.mxu0 %v1425
    %1484 = vmatpush.msra.mxu0 %v1424
    %1485 = vmatpush.msra.mxu0 %v1423
    %1486 = vmatpush.msra.mxu0 %v1422
    %1487 = vmatmul.f32.gmra.mxu0 %v137
    %v1488 = vpop.f32.mrf.mxu0
    %v1489 = vadd.f32 %v1448, %v1488
    %1490 = vmatmul.f32.gmra.mxu0 %v140
    %v1491 = vpop.f32.mrf.mxu0
    %v1492 = vadd.f32 %v1451, %v1491
    %1493 = vmatmul.f32.gmra.mxu0 %v143
    %v1494 = vpop.f32.mrf.mxu0
    %v1495 = vadd.f32 %v1454, %v1494
    %1496 = vmatmul.f32.gmra.mxu0 %v146
    %v1497 = vpop.f32.mrf.mxu0
    %v1498 = vadd.f32 %v1457, %v1497
    %1499 = vmatmul.f32.gmra.mxu0 %v149
    %v1500 = vpop.f32.mrf.mxu0
    %v1501 = vadd.f32 %v1460, %v1500
    %1502 = vmatmul.f32.gmra.mxu0 %v152
    %v1503 = vpop.f32.mrf.mxu0
    %v1504 = vadd.f32 %v1463, %v1503
    %1505 = vmatmul.f32.gmra.mxu0 %v155
    %v1506 = vpop.f32.mrf.mxu0
    %v1507 = vadd.f32 %v1466, %v1506
    %1508 = vmatmul.f32.gmra.mxu0 %v158
    %v1509 = vpop.f32.mrf.mxu0
    %v1510 = vadd.f32 %v1469, %v1509
    %1511 = vdwg.mxu0
    %1516 = vrot.lane.b32.xlu0 %v1501, 96
    %v1517 = vpop.permute.xlu0 %1516
    %1518 = vrot.lane.b32.xlu0 %v1504, 96
    %v1519 = vpop.permute.xlu0 %1518
    %1520 = vrot.lane.b32.xlu0 %v1507, 96
    %v1521 = vpop.permute.xlu0 %1520
    %1522 = vrot.lane.b32.xlu0 %v1510, 96
    %v1523 = vpop.permute.xlu0 %1522
    %vm1528 = vcmask 785408
    %v1529 = vsel %vm1528, %v1489, %v1517
    %v1530 = vsel %vm1528, %v1492, %v1519
    %v1531 = vsel %vm1528, %v1495, %v1521
    %v1532 = vsel %vm1528, %v1498, %v1523
    %v1533 = vld [vmem:[%s3] sm:$0xff]
    %v1534 = vld [vmem:[%s3 + $0x8] sm:$0xff]
    %v1536 = vsel %vm671, %v1533, 0
    %v1539 = vsel %vm671, %v1534, 0
    %1541 = vmatpush.msra.mxu0 0.0
    %1542 = vmatpush.msra.mxu0 0.0
    %1543 = vmatpush.msra.mxu0 0.0
    %1544 = vmatpush.msra.mxu0 0.0
    %1545 = vmatpush.msra.mxu0 0.0
    %1546 = vmatpush.msra.mxu0 0.0
    %1547 = vmatpush.msra.mxu0 0.0
    %1548 = vmatpush.msra.mxu0 0.0
    %1549 = vmatpush.msra.mxu0 0.0
    %1550 = vmatpush.msra.mxu0 0.0
    %1551 = vmatpush.msra.mxu0 0.0
    %1552 = vmatpush.msra.mxu0 0.0
    %1553 = vmatpush.msra.mxu0 %v1532
    %1554 = vmatpush.msra.mxu0 %v1531
    %1555 = vmatpush.msra.mxu0 %v1530
    %1556 = vmatpush.msra.mxu0 %v1529
    %1557 = vmatmul.f32.gmra.mxu0 %v1536
    %v1558 = vpop.f32.mrf.mxu0
    %v1559 = vadd.f32 0.0, %v1558
    %1560 = vmatmul.f32.gmra.mxu0 %v1539
    %v1561 = vpop.f32.mrf.mxu0
    %v1562 = vadd.f32 0.0, %v1561
    %1563 = vdwg.mxu0
    %1564 = vmatpush.msra.mxu0 0.0
    %1565 = vmatpush.msra.mxu0 0.0
    %1566 = vmatpush.msra.mxu0 0.0
    %1567 = vmatpush.msra.mxu0 0.0
    %1568 = vmatpush.msra.mxu0 0.0
    %1569 = vmatpush.msra.mxu0 0.0
    %1570 = vmatpush.msra.mxu0 0.0
    %1571 = vmatpush.msra.mxu0 0.0
    %1572 = vmatpush.msra.mxu0 0.0
    %1573 = vmatpush.msra.mxu0 0.0
    %1574 = vmatpush.msra.mxu0 0.0
    %1575 = vmatpush.msra.mxu0 0.0
    %1576 = vmatpush.msra.mxu0 %v1523
    %1577 = vmatpush.msra.mxu0 %v1521
    %1578 = vmatpush.msra.mxu0 %v1519
    %1579 = vmatpush.msra.mxu0 %v1517
    %1580 = vmatmul.f32.gmra.mxu0 %v1536
    %v1581 = vpop.f32.mrf.mxu0
    %v1582 = vadd.f32 0.0, %v1581
    %1583 = vmatmul.f32.gmra.mxu0 %v1539
    %v1584 = vpop.f32.mrf.mxu0
    %v1585 = vadd.f32 0.0, %v1584
    %1586 = vdwg.mxu0
    %1587 = vst.msk [vmem:[%s11] sm:$0xff] %vm1528, %v1559
    %1588 = vst.msk [vmem:[%s11 + $0x8] sm:$0xff] %vm1528, %v1562
    %1593 = vrot.lane.b32.xlu0 %v1559, 32
    %v1594 = vpop.permute.xlu0 %1593
    %1595 = vrot.lane.b32.xlu0 %v1582, 32
    %v1596 = vpop.permute.xlu0 %1595
    %1597 = vrot.lane.b32.xlu0 %v1562, 32
    %v1598 = vpop.permute.xlu0 %1597
    %1599 = vrot.lane.b32.xlu0 %v1585, 32
    %v1600 = vpop.permute.xlu0 %1599
    %v1601 = vsel %vm671, %v1594, %v1596
    %v1602 = vsel %vm671, %v1598, %v1600
    %1605 = vst.msk [vmem:[%s12] sm:$0xff] %vm1528, %v1601
    %1606 = vst.msk [vmem:[%s12 + $0x8] sm:$0xff] %vm1528, %v1602
    %v1607 = vsel %vm1528, %v1559, -inf
    %v1608 = vsel %vm1528, %v1562, -inf
    %v1609 = vmax.f32 %v1607, %v1608
    %1610 = vmax.xlane.f32.xlu0 %v1609
    %v1611 = vpop.xlane.xlu0 %1610
    %v1612 = vrot.slane %v1611, 4
    %v1613 = vmax.f32 %v1611, %v1612
    %v1614 = vrot.slane %v1613, 2
    %v1615 = vmax.f32 %v1613, %v1614
    %v1616 = vrot.slane %v1615, 1
    %v1617 = vmax.f32 %v1615, %v1616
    %s1618 = vtos %v1617
    %v1619 = vstv %s1618
    %1620 = vst [vmem:[%s9] sm:$0xff] %v1619
    %v1621 = vsel %vm1528, %v1559, inf
    %v1622 = vsel %vm1528, %v1562, inf
    %v1623 = vmin.f32 %v1621, %v1622
    %1624 = vmin.xlane.f32.xlu0 %v1623
    %v1625 = vpop.xlane.xlu0 %1624
    %v1626 = vrot.slane %v1625, 4
    %v1627 = vmin.f32 %v1625, %v1626
    %v1628 = vrot.slane %v1627, 2
    %v1629 = vmin.f32 %v1627, %v1628
    %v1630 = vrot.slane %v1629, 1
    %v1631 = vmin.f32 %v1629, %v1630
    %s1632 = vtos %v1631
    %v1633 = vstv %s1632
    %1634 = vst [vmem:[%s10] sm:$0xff] %v1633
    // Predicated region
    $region34: #{msssim.2} parent=1 // pred_check
      _
    $region35: #{msssim.2} parent=1 // pred_check_branch
      %1636 = sbr.rel (0) target = $region37
    $region36: #{msssim.2} parent=1 // pred_region
      _
    $region37: #{msssim.2} parent=1 // pred_fallthru
      _
    // Predicated region
    $region38: #{msssim.2} parent=1 // pred_check
      _
    $region39: #{msssim.2} parent=1 // pred_check_branch
      %1638 = sbr.rel (0) target = $region41
    $region40: #{msssim.2} parent=1 // pred_region
      _
    $region41: #{msssim.2} parent=1 // pred_fallthru
      _
    // Predicated region
    $region42: #{msssim.2} parent=1 // pred_check
      _
    $region43: #{msssim.2} parent=1 // pred_check_branch
      %1640 = sbr.rel (0) target = $region45
    $region44: #{msssim.2} parent=1 // pred_region
      _
    $region45: #{msssim.2} parent=1 // pred_fallthru
      _
    // Predicated region
    $region46: #{msssim.2} parent=1 // pred_check
      _
    $region47: #{msssim.2} parent=1 // pred_check_branch
      %1642 = sbr.rel (0) target = $region49
    $region48: #{msssim.2} parent=1 // pred_region
      _
    $region49: #{msssim.2} parent=1 // pred_fallthru
      _
    // Predicated region
    $region50: #{msssim.2} parent=1 // pred_check
      _
    $region51: #{msssim.2} parent=1 // pred_check_branch
      %1644 = sbr.rel (0) target = $region53
    $region52: #{msssim.2} parent=1 // pred_region
      _
    $region53: #{msssim.2} parent=1 // pred_fallthru
      _
    // Predicated region
    $region54: #{msssim.2} parent=1 // pred_check
      _
    $region55: #{msssim.2} parent=1 // pred_check_branch
      %1646 = sbr.rel (0) target = $region57
    $region56: #{msssim.2} parent=1 // pred_region
      _
    $region57: #{msssim.2} parent=1 // pred_fallthru
      _
    // Predicated region
    $region58: #{msssim.2} parent=1 // pred_check
      _
    $region59: #{msssim.2} parent=1 // pred_check_branch
      %1648 = sbr.rel (0) target = $region61
    $region60: #{msssim.2} parent=1 // pred_region
      _
    $region61: #{msssim.2} parent=1 // pred_fallthru
      _
    // Predicated region
    $region62: #{msssim.2} parent=1 // pred_check
      _
    $region63: #{msssim.2} parent=1 // pred_check_branch
      %1650 = sbr.rel (0) target = $region65
    $region64: #{msssim.2} parent=1 // pred_region
      _
    $region65: #{msssim.2} parent=1 // pred_fallthru
      _
    // Predicated region
    $region66: #{msssim.2} parent=1 // pred_check
      _
    $region67: #{msssim.2} parent=1 // pred_check_branch
      %1652 = sbr.rel (0) target = $region69
    $region68: #{msssim.2} parent=1 // pred_region
      _
    $region69: #{msssim.2} parent=1 // pred_fallthru
      _
    // Predicated region
    $region70: #{msssim.2} parent=1 // pred_check
      _
    $region71: #{msssim.2} parent=1 // pred_check_branch
      %1654 = sbr.rel (0) target = $region73
    $region72: #{msssim.2} parent=1 // pred_region
      _
    $region73: #{msssim.2} parent=1 // pred_fallthru
      _
    // Predicated region
    $region74: #{msssim.2} parent=1 // pred_check
      _
    $region75: #{msssim.2} parent=1 // pred_check_branch
      %1656 = sbr.rel (0) target = $region77
    $region76: #{msssim.2} parent=1 // pred_region
      _
    $region77: #{msssim.2} parent=1 // pred_fallthru
      _
    // Predicated region
    $region78: #{msssim.2} parent=1 // pred_check
      _
    $region79: #{msssim.2} parent=1 // pred_check_branch
      %1658 = sbr.rel (0) target = $region81
    $region80: #{msssim.2} parent=1 // pred_region
      _
    $region81: #{msssim.2} parent=1 // pred_fallthru
      _
    %1659 = vsyncpa [#allocation3], 1

</llo_original>
